<compile_context>
chip_gen: v7x
topology: tpu7x:2x2x1
jax: 0.10.0
libtpu: 0.0.40
codegen_flags: <defaults>
</compile_context>

<pallas_src>
import math
import numpy as np

import jax
import jax.numpy as jnp
from jax import lax
from jax.experimental import pallas as pl
from jax.experimental.pallas import tpu as pltpu


def decoder_kernel(x_ref, wih_ref, whh_ref, b_ref, wout_ref, bout_ref, out_ref):
    """Single-invocation kernel (no grid): everything fits comfortably in VMEM.

    Gate blocks are lane-padded to Hp (multiple of 128) lanes each so the
    per-step gate slices are whole-vreg extracts.  Padded weight columns /
    rows and bias lanes are zero, which keeps padded lanes of h and c exactly
    zero through the recurrence:
        g_pad = tanh(0) = 0,  c_pad = 0.5*0 + 0.5*0 = 0,  h_pad = 0.5*tanh(0) = 0.

    x_ref   : (1, input_dim)     latent (same input at every timestep)
    wih_ref : (input_dim, 4*Hp)  W_ih^T, gate order [i, f, g, o], lane-padded
    whh_ref : (Hp, 4*Hp)         W_hh^T, row + lane zero-padded
    b_ref   : (1, 4*Hp)          b_ih + b_hh, lane zero-padded
    wout_ref: (Hp, n_features)   output_layer.weight^T, row zero-padded
    bout_ref: (1, n_features)    output_layer.bias
    out_ref : (seq_len, n_features)
    """
    Hp = whh_ref.shape[0]
    seq_len = out_ref.shape[0]

    # One input projection for all timesteps; lives in vregs for the whole loop.
    xp = (jnp.dot(x_ref[...], wih_ref[...],
                  preferred_element_type=jnp.float32) + b_ref[...])       # (1, 4*Hp)

    h = jnp.zeros((1, Hp), jnp.float32)
    c = jnp.zeros((1, Hp), jnp.float32)
    hs = []
    # Fully unrolled recurrence (seq_len is a compile-time constant); state
    # stays in vregs, no VMEM traffic on the serial dependency chain.
    for _ in range(seq_len):
        gates = xp + jnp.dot(h, whh_ref[...],
                             preferred_element_type=jnp.float32)          # (1, 4*Hp)
        i = jax.nn.sigmoid(gates[:, 0 * Hp:1 * Hp])
        f = jax.nn.sigmoid(gates[:, 1 * Hp:2 * Hp])
        g = jnp.tanh(gates[:, 2 * Hp:3 * Hp])
        o = jax.nn.sigmoid(gates[:, 3 * Hp:4 * Hp])
        c = f * c + i * g
        h = o * jnp.tanh(c)
        hs.append(h)

    # Epilogue: one matmul + one store (no per-step masked sublane stores).
    h_all = jnp.concatenate(hs, axis=0)                                   # (seq_len, Hp)
    out_ref[...] = (jnp.dot(h_all, wout_ref[...],
                            preferred_element_type=jnp.float32) + bout_ref[...])


def decoder_forward(x, params, *, seq_len, n_features, input_dim):
    """JAX glue + pallas_call.  Reproduces Decoder.forward exactly."""
    w_ih, w_hh, b_ih, b_hh, w_out, b_out = params
    H = 2 * input_dim
    # The PyTorch reshape `(seq_len, hidden_dim)` after the LSTM is only
    # well-formed when n_features == 1 (the module's intended configuration).
    assert n_features == 1, "Decoder.forward reshape requires n_features == 1"

    # With n_features == 1, x.repeat(seq_len, 1).reshape(1, seq_len, input_dim)
    # feeds the *same* latent row to every LSTM step, so we never materialize
    # the tiled sequence -- just pass the single latent row.
    x_row = jnp.asarray(x, jnp.float32).reshape(1, input_dim)

    # Lane-align each gate to its own (multiple of 128)-lane slot; all padding
    # is zero so the padded lanes are inert inside the kernel.
    Hp = ((H + 127) // 128) * 128
    w_ih = jnp.asarray(w_ih, jnp.float32)                  # (4H, input_dim)
    w_hh = jnp.asarray(w_hh, jnp.float32)                  # (4H, H)
    b = jnp.asarray(b_ih, jnp.float32) + jnp.asarray(b_hh, jnp.float32)  # (4H,)

    wih_pad = jnp.zeros((input_dim, 4 * Hp), jnp.float32)
    whh_pad = jnp.zeros((Hp, 4 * Hp), jnp.float32)
    b_pad = jnp.zeros((1, 4 * Hp), jnp.float32)
    for k in range(4):  # PyTorch gate order [i, f, g, o]
        wih_pad = wih_pad.at[:, k * Hp:k * Hp + H].set(w_ih[k * H:(k + 1) * H, :].T)
        whh_pad = whh_pad.at[:H, k * Hp:k * Hp + H].set(w_hh[k * H:(k + 1) * H, :].T)
        b_pad = b_pad.at[:, k * Hp:k * Hp + H].set(b[k * H:(k + 1) * H])

    wout_pad = jnp.zeros((Hp, n_features), jnp.float32)
    wout_pad = wout_pad.at[:H, :].set(jnp.asarray(w_out, jnp.float32).T)
    bout = jnp.asarray(b_out, jnp.float32).reshape(1, n_features)

    # TODO(synk): on v6e/v7x the recurrent matmul could take bf16 operands
    # (f32 accumulation) for shorter per-step MXU latency; kept f32 here to
    # preserve the 1e-3 match against the f32 reference over 8 steps.

    flops = (2 * input_dim * 4 * Hp                       # input projection
             + seq_len * (2 * Hp * 4 * Hp + 10 * Hp)      # recurrence
             + 2 * seq_len * Hp * n_features)             # output layer
    transcendentals = seq_len * 5 * Hp                    # 3 sigmoid + 2 tanh per step
    bytes_accessed = 4 * (input_dim + input_dim * 4 * Hp + Hp * 4 * Hp
                          + 4 * Hp + Hp * n_features + n_features
                          + seq_len * n_features)

    vmem = pl.BlockSpec(memory_space=pltpu.MemorySpace.VMEM)
    return pl.pallas_call(
        decoder_kernel,
        out_shape=jax.ShapeDtypeStruct((seq_len, n_features), jnp.float32),
        in_specs=[vmem] * 6,
        out_specs=vmem,
        cost_estimate=pl.CostEstimate(flops=flops,
                                      transcendentals=transcendentals,
                                      bytes_accessed=bytes_accessed),
    )(x_row, wih_pad, whh_pad, b_pad, wout_pad, bout)


def decoder_reference(x, params, *, seq_len, n_features, input_dim):
    """Pure-JAX reference matching torch.nn.LSTM + nn.Linear semantics."""
    w_ih, w_hh, b_ih, b_hh, w_out, b_out = params
    H = 2 * input_dim
    x_rep = jnp.tile(x, (seq_len, n_features))
    xs = x_rep.reshape(n_features, seq_len, input_dim)[0]      # (seq_len, input_dim)

    def cell(carry, x_t):
        h, c = carry
        gates = x_t @ w_ih.T + b_ih + h @ w_hh.T + b_hh
        i, f, g, o = jnp.split(gates, 4)
        i = jax.nn.sigmoid(i)
        f = jax.nn.sigmoid(f)
        g = jnp.tanh(g)
        o = jax.nn.sigmoid(o)
        c = f * c + i * g
        h = o * jnp.tanh(c)
        return (h, c), h

    (_, _), hs = lax.scan(cell, (jnp.zeros(H), jnp.zeros(H)), xs)
    hs = hs.reshape(seq_len, H)
    return hs @ w_out.T + b_out


def init_params(key, *, n_features, input_dim):
    """Deterministic init matching the PyTorch parameter shapes."""
    H = 2 * input_dim
    k = 1.0 / math.sqrt(H)
    ks = jax.random.split(key, 6)
    u = lambda kk, shape: jax.random.uniform(kk, shape, jnp.float32, -k, k)
    w_ih = u(ks[0], (4 * H, input_dim))     # rnn.weight_ih_l0
    w_hh = u(ks[1], (4 * H, H))             # rnn.weight_hh_l0
    b_ih = u(ks[2], (4 * H,))               # rnn.bias_ih_l0
    b_hh = u(ks[3], (4 * H,))               # rnn.bias_hh_l0
    w_out = u(ks[4], (n_features, H))       # output_layer.weight
    b_out = u(ks[5], (n_features,))         # output_layer.bias
    return (w_ih, w_hh, b_ih, b_hh, w_out, b_out)


if __name__ == "__main__":
    input_dim = 20          # module default latent size
    seq_len = 8
    n_features = 1          # required by the reshape in Decoder.forward

    key = jax.random.PRNGKey(0)
    kx, kp = jax.random.split(key)
    x = jax.random.normal(kx, (n_features, input_dim), jnp.float32)  # encoder latent
    params = init_params(kp, n_features=n_features, input_dim=input_dim)

    out = decoder_forward(x, params, seq_len=seq_len,
                          n_features=n_features, input_dim=input_dim)
    out = jax.block_until_ready(out)

    ref = decoder_reference(x, params, seq_len=seq_len,
                            n_features=n_features, input_dim=input_dim)
    np.testing.assert_allclose(np.asarray(out), np.asarray(ref),
                               rtol=1e-3, atol=1e-3)
    assert out.shape == (seq_len, n_features)
    print("KERNEL_OK")
</pallas_src>

<mosaic_0001>
module attributes {stable_mosaic.version = 11 : i64} {
  func.func @decoder_kernel(%arg0: memref<1x20xf32, #tpu.memory_space<vmem>>, %arg1: memref<20x512xf32, #tpu.memory_space<vmem>>, %arg2: memref<128x512xf32, #tpu.memory_space<vmem>>, %arg3: memref<1x512xf32, #tpu.memory_space<vmem>>, %arg4: memref<128x1xf32, #tpu.memory_space<vmem>>, %arg5: memref<1x1xf32, #tpu.memory_space<vmem>>, %arg6: memref<8x1xf32, #tpu.memory_space<vmem>>) attributes {dimension_semantics = [], scalar_prefetch = 0 : i64, scratch_operands = 0 : i64, tpu.core_type = #tpu.core_type<tc>} {
    %c0 = arith.constant 0 : index
    %c0_0 = arith.constant 0 : index
    %0 = vector.load %arg0[%c0, %c0_0] : memref<1x20xf32, #tpu.memory_space<vmem>>, vector<1x20xf32>
    %c0_1 = arith.constant 0 : index
    %c0_2 = arith.constant 0 : index
    %1 = vector.load %arg1[%c0_1, %c0_2] : memref<20x512xf32, #tpu.memory_space<vmem>>, vector<20x512xf32>
    %cst = arith.constant dense<0.000000e+00> : vector<1x512xf32>
    %2 = tpu.matmul %0, %1, %cst {dimension_numbers = #tpu.dot_dimension_numbers<[1], [0], [0], [1], [0, 0, 1, 1], [], []>} : vector<1x20xf32>, vector<20x512xf32>, vector<1x512xf32> -> vector<1x512xf32>
    %c0_3 = arith.constant 0 : index
    %c0_4 = arith.constant 0 : index
    %3 = vector.load %arg3[%c0_3, %c0_4] : memref<1x512xf32, #tpu.memory_space<vmem>>, vector<1x512xf32>
    %4 = arith.addf %2, %3 : vector<1x512xf32>
    %cst_5 = arith.constant 0.000000e+00 : f32
    %5 = vector.broadcast %cst_5 : f32 to vector<1x128xf32>
    %cst_6 = arith.constant 0.000000e+00 : f32
    %6 = vector.broadcast %cst_6 : f32 to vector<1x128xf32>
    %c0_7 = arith.constant 0 : index
    %c0_8 = arith.constant 0 : index
    %7 = vector.load %arg2[%c0_7, %c0_8] : memref<128x512xf32, #tpu.memory_space<vmem>>, vector<128x512xf32>
    %cst_9 = arith.constant dense<0.000000e+00> : vector<1x512xf32>
    %8 = tpu.matmul %5, %7, %cst_9 {dimension_numbers = #tpu.dot_dimension_numbers<[1], [0], [0], [1], [0, 0, 1, 1], [], []>} : vector<1x128xf32>, vector<128x512xf32>, vector<1x512xf32> -> vector<1x512xf32>
    %9 = arith.addf %4, %8 : vector<1x512xf32>
    %10 = vector.extract_strided_slice %9 {offsets = [0, 0], sizes = [1, 128], strides = [1, 1]} : vector<1x512xf32> to vector<1x128xf32>
    %11 = arith.negf %10 : vector<1x128xf32>
    %12 = math.exp %11 : vector<1x128xf32>
    %cst_10 = arith.constant 1.000000e+00 : f32
    %13 = vector.broadcast %cst_10 : f32 to vector<1x128xf32>
    %14 = arith.addf %13, %12 : vector<1x128xf32>
    %15 = arith.divf %13, %14 : vector<1x128xf32>
    %16 = vector.extract_strided_slice %9 {offsets = [0, 128], sizes = [1, 128], strides = [1, 1]} : vector<1x512xf32> to vector<1x128xf32>
    %17 = arith.negf %16 : vector<1x128xf32>
    %18 = math.exp %17 : vector<1x128xf32>
    %cst_11 = arith.constant 1.000000e+00 : f32
    %19 = vector.broadcast %cst_11 : f32 to vector<1x128xf32>
    %20 = arith.addf %19, %18 : vector<1x128xf32>
    %21 = arith.divf %19, %20 : vector<1x128xf32>
    %22 = vector.extract_strided_slice %9 {offsets = [0, 256], sizes = [1, 128], strides = [1, 1]} : vector<1x512xf32> to vector<1x128xf32>
    %23 = math.tanh %22 : vector<1x128xf32>
    %24 = vector.extract_strided_slice %9 {offsets = [0, 384], sizes = [1, 128], strides = [1, 1]} : vector<1x512xf32> to vector<1x128xf32>
    %25 = arith.negf %24 : vector<1x128xf32>
    %26 = math.exp %25 : vector<1x128xf32>
    %cst_12 = arith.constant 1.000000e+00 : f32
    %27 = vector.broadcast %cst_12 : f32 to vector<1x128xf32>
    %28 = arith.addf %27, %26 : vector<1x128xf32>
    %29 = arith.divf %27, %28 : vector<1x128xf32>
    %30 = arith.mulf %21, %6 : vector<1x128xf32>
    %31 = arith.mulf %15, %23 : vector<1x128xf32>
    %32 = arith.addf %30, %31 : vector<1x128xf32>
    %33 = math.tanh %32 : vector<1x128xf32>
    %34 = arith.mulf %29, %33 : vector<1x128xf32>
    %c0_13 = arith.constant 0 : index
    %c0_14 = arith.constant 0 : index
    %35 = vector.load %arg2[%c0_13, %c0_14] : memref<128x512xf32, #tpu.memory_space<vmem>>, vector<128x512xf32>
    %cst_15 = arith.constant dense<0.000000e+00> : vector<1x512xf32>
    %36 = tpu.matmul %34, %35, %cst_15 {dimension_numbers = #tpu.dot_dimension_numbers<[1], [0], [0], [1], [0, 0, 1, 1], [], []>} : vector<1x128xf32>, vector<128x512xf32>, vector<1x512xf32> -> vector<1x512xf32>
    %37 = arith.addf %4, %36 : vector<1x512xf32>
    %38 = vector.extract_strided_slice %37 {offsets = [0, 0], sizes = [1, 128], strides = [1, 1]} : vector<1x512xf32> to vector<1x128xf32>
    %39 = arith.negf %38 : vector<1x128xf32>
    %40 = math.exp %39 : vector<1x128xf32>
    %cst_16 = arith.constant 1.000000e+00 : f32
    %41 = vector.broadcast %cst_16 : f32 to vector<1x128xf32>
    %42 = arith.addf %41, %40 : vector<1x128xf32>
    %43 = arith.divf %41, %42 : vector<1x128xf32>
    %44 = vector.extract_strided_slice %37 {offsets = [0, 128], sizes = [1, 128], strides = [1, 1]} : vector<1x512xf32> to vector<1x128xf32>
    %45 = arith.negf %44 : vector<1x128xf32>
    %46 = math.exp %45 : vector<1x128xf32>
    %cst_17 = arith.constant 1.000000e+00 : f32
    %47 = vector.broadcast %cst_17 : f32 to vector<1x128xf32>
    %48 = arith.addf %47, %46 : vector<1x128xf32>
    %49 = arith.divf %47, %48 : vector<1x128xf32>
    %50 = vector.extract_strided_slice %37 {offsets = [0, 256], sizes = [1, 128], strides = [1, 1]} : vector<1x512xf32> to vector<1x128xf32>
    %51 = math.tanh %50 : vector<1x128xf32>
    %52 = vector.extract_strided_slice %37 {offsets = [0, 384], sizes = [1, 128], strides = [1, 1]} : vector<1x512xf32> to vector<1x128xf32>
    %53 = arith.negf %52 : vector<1x128xf32>
    %54 = math.exp %53 : vector<1x128xf32>
    %cst_18 = arith.constant 1.000000e+00 : f32
    %55 = vector.broadcast %cst_18 : f32 to vector<1x128xf32>
    %56 = arith.addf %55, %54 : vector<1x128xf32>
    %57 = arith.divf %55, %56 : vector<1x128xf32>
    %58 = arith.mulf %49, %32 : vector<1x128xf32>
    %59 = arith.mulf %43, %51 : vector<1x128xf32>
    %60 = arith.addf %58, %59 : vector<1x128xf32>
    %61 = math.tanh %60 : vector<1x128xf32>
    %62 = arith.mulf %57, %61 : vector<1x128xf32>
    %c0_19 = arith.constant 0 : index
    %c0_20 = arith.constant 0 : index
    %63 = vector.load %arg2[%c0_19, %c0_20] : memref<128x512xf32, #tpu.memory_space<vmem>>, vector<128x512xf32>
    %cst_21 = arith.constant dense<0.000000e+00> : vector<1x512xf32>
    %64 = tpu.matmul %62, %63, %cst_21 {dimension_numbers = #tpu.dot_dimension_numbers<[1], [0], [0], [1], [0, 0, 1, 1], [], []>} : vector<1x128xf32>, vector<128x512xf32>, vector<1x512xf32> -> vector<1x512xf32>
    %65 = arith.addf %4, %64 : vector<1x512xf32>
    %66 = vector.extract_strided_slice %65 {offsets = [0, 0], sizes = [1, 128], strides = [1, 1]} : vector<1x512xf32> to vector<1x128xf32>
    %67 = arith.negf %66 : vector<1x128xf32>
    %68 = math.exp %67 : vector<1x128xf32>
    %cst_22 = arith.constant 1.000000e+00 : f32
    %69 = vector.broadcast %cst_22 : f32 to vector<1x128xf32>
    %70 = arith.addf %69, %68 : vector<1x128xf32>
    %71 = arith.divf %69, %70 : vector<1x128xf32>
    %72 = vector.extract_strided_slice %65 {offsets = [0, 128], sizes = [1, 128], strides = [1, 1]} : vector<1x512xf32> to vector<1x128xf32>
    %73 = arith.negf %72 : vector<1x128xf32>
    %74 = math.exp %73 : vector<1x128xf32>
    %cst_23 = arith.constant 1.000000e+00 : f32
    %75 = vector.broadcast %cst_23 : f32 to vector<1x128xf32>
    %76 = arith.addf %75, %74 : vector<1x128xf32>
    %77 = arith.divf %75, %76 : vector<1x128xf32>
    %78 = vector.extract_strided_slice %65 {offsets = [0, 256], sizes = [1, 128], strides = [1, 1]} : vector<1x512xf32> to vector<1x128xf32>
    %79 = math.tanh %78 : vector<1x128xf32>
    %80 = vector.extract_strided_slice %65 {offsets = [0, 384], sizes = [1, 128], strides = [1, 1]} : vector<1x512xf32> to vector<1x128xf32>
    %81 = arith.negf %80 : vector<1x128xf32>
    %82 = math.exp %81 : vector<1x128xf32>
    %cst_24 = arith.constant 1.000000e+00 : f32
    %83 = vector.broadcast %cst_24 : f32 to vector<1x128xf32>
    %84 = arith.addf %83, %82 : vector<1x128xf32>
    %85 = arith.divf %83, %84 : vector<1x128xf32>
    %86 = arith.mulf %77, %60 : vector<1x128xf32>
    %87 = arith.mulf %71, %79 : vector<1x128xf32>
    %88 = arith.addf %86, %87 : vector<1x128xf32>
    %89 = math.tanh %88 : vector<1x128xf32>
    %90 = arith.mulf %85, %89 : vector<1x128xf32>
    %c0_25 = arith.constant 0 : index
    %c0_26 = arith.constant 0 : index
    %91 = vector.load %arg2[%c0_25, %c0_26] : memref<128x512xf32, #tpu.memory_space<vmem>>, vector<128x512xf32>
    %cst_27 = arith.constant dense<0.000000e+00> : vector<1x512xf32>
    %92 = tpu.matmul %90, %91, %cst_27 {dimension_numbers = #tpu.dot_dimension_numbers<[1], [0], [0], [1], [0, 0, 1, 1], [], []>} : vector<1x128xf32>, vector<128x512xf32>, vector<1x512xf32> -> vector<1x512xf32>
    %93 = arith.addf %4, %92 : vector<1x512xf32>
    %94 = vector.extract_strided_slice %93 {offsets = [0, 0], sizes = [1, 128], strides = [1, 1]} : vector<1x512xf32> to vector<1x128xf32>
    %95 = arith.negf %94 : vector<1x128xf32>
    %96 = math.exp %95 : vector<1x128xf32>
    %cst_28 = arith.constant 1.000000e+00 : f32
    %97 = vector.broadcast %cst_28 : f32 to vector<1x128xf32>
    %98 = arith.addf %97, %96 : vector<1x128xf32>
    %99 = arith.divf %97, %98 : vector<1x128xf32>
    %100 = vector.extract_strided_slice %93 {offsets = [0, 128], sizes = [1, 128], strides = [1, 1]} : vector<1x512xf32> to vector<1x128xf32>
    %101 = arith.negf %100 : vector<1x128xf32>
    %102 = math.exp %101 : vector<1x128xf32>
    %cst_29 = arith.constant 1.000000e+00 : f32
    %103 = vector.broadcast %cst_29 : f32 to vector<1x128xf32>
    %104 = arith.addf %103, %102 : vector<1x128xf32>
    %105 = arith.divf %103, %104 : vector<1x128xf32>
    %106 = vector.extract_strided_slice %93 {offsets = [0, 256], sizes = [1, 128], strides = [1, 1]} : vector<1x512xf32> to vector<1x128xf32>
    %107 = math.tanh %106 : vector<1x128xf32>
    %108 = vector.extract_strided_slice %93 {offsets = [0, 384], sizes = [1, 128], strides = [1, 1]} : vector<1x512xf32> to vector<1x128xf32>
    %109 = arith.negf %108 : vector<1x128xf32>
    %110 = math.exp %109 : vector<1x128xf32>
    %cst_30 = arith.constant 1.000000e+00 : f32
    %111 = vector.broadcast %cst_30 : f32 to vector<1x128xf32>
    %112 = arith.addf %111, %110 : vector<1x128xf32>
    %113 = arith.divf %111, %112 : vector<1x128xf32>
    %114 = arith.mulf %105, %88 : vector<1x128xf32>
    %115 = arith.mulf %99, %107 : vector<1x128xf32>
    %116 = arith.addf %114, %115 : vector<1x128xf32>
    %117 = math.tanh %116 : vector<1x128xf32>
    %118 = arith.mulf %113, %117 : vector<1x128xf32>
    %c0_31 = arith.constant 0 : index
    %c0_32 = arith.constant 0 : index
    %119 = vector.load %arg2[%c0_31, %c0_32] : memref<128x512xf32, #tpu.memory_space<vmem>>, vector<128x512xf32>
    %cst_33 = arith.constant dense<0.000000e+00> : vector<1x512xf32>
    %120 = tpu.matmul %118, %119, %cst_33 {dimension_numbers = #tpu.dot_dimension_numbers<[1], [0], [0], [1], [0, 0, 1, 1], [], []>} : vector<1x128xf32>, vector<128x512xf32>, vector<1x512xf32> -> vector<1x512xf32>
    %121 = arith.addf %4, %120 : vector<1x512xf32>
    %122 = vector.extract_strided_slice %121 {offsets = [0, 0], sizes = [1, 128], strides = [1, 1]} : vector<1x512xf32> to vector<1x128xf32>
    %123 = arith.negf %122 : vector<1x128xf32>
    %124 = math.exp %123 : vector<1x128xf32>
    %cst_34 = arith.constant 1.000000e+00 : f32
    %125 = vector.broadcast %cst_34 : f32 to vector<1x128xf32>
    %126 = arith.addf %125, %124 : vector<1x128xf32>
    %127 = arith.divf %125, %126 : vector<1x128xf32>
    %128 = vector.extract_strided_slice %121 {offsets = [0, 128], sizes = [1, 128], strides = [1, 1]} : vector<1x512xf32> to vector<1x128xf32>
    %129 = arith.negf %128 : vector<1x128xf32>
    %130 = math.exp %129 : vector<1x128xf32>
    %cst_35 = arith.constant 1.000000e+00 : f32
    %131 = vector.broadcast %cst_35 : f32 to vector<1x128xf32>
    %132 = arith.addf %131, %130 : vector<1x128xf32>
    %133 = arith.divf %131, %132 : vector<1x128xf32>
    %134 = vector.extract_strided_slice %121 {offsets = [0, 256], sizes = [1, 128], strides = [1, 1]} : vector<1x512xf32> to vector<1x128xf32>
    %135 = math.tanh %134 : vector<1x128xf32>
    %136 = vector.extract_strided_slice %121 {offsets = [0, 384], sizes = [1, 128], strides = [1, 1]} : vector<1x512xf32> to vector<1x128xf32>
    %137 = arith.negf %136 : vector<1x128xf32>
    %138 = math.exp %137 : vector<1x128xf32>
    %cst_36 = arith.constant 1.000000e+00 : f32
    %139 = vector.broadcast %cst_36 : f32 to vector<1x128xf32>
    %140 = arith.addf %139, %138 : vector<1x128xf32>
    %141 = arith.divf %139, %140 : vector<1x128xf32>
    %142 = arith.mulf %133, %116 : vector<1x128xf32>
    %143 = arith.mulf %127, %135 : vector<1x128xf32>
    %144 = arith.addf %142, %143 : vector<1x128xf32>
    %145 = math.tanh %144 : vector<1x128xf32>
    %146 = arith.mulf %141, %145 : vector<1x128xf32>
    %c0_37 = arith.constant 0 : index
    %c0_38 = arith.constant 0 : index
    %147 = vector.load %arg2[%c0_37, %c0_38] : memref<128x512xf32, #tpu.memory_space<vmem>>, vector<128x512xf32>
    %cst_39 = arith.constant dense<0.000000e+00> : vector<1x512xf32>
    %148 = tpu.matmul %146, %147, %cst_39 {dimension_numbers = #tpu.dot_dimension_numbers<[1], [0], [0], [1], [0, 0, 1, 1], [], []>} : vector<1x128xf32>, vector<128x512xf32>, vector<1x512xf32> -> vector<1x512xf32>
    %149 = arith.addf %4, %148 : vector<1x512xf32>
    %150 = vector.extract_strided_slice %149 {offsets = [0, 0], sizes = [1, 128], strides = [1, 1]} : vector<1x512xf32> to vector<1x128xf32>
    %151 = arith.negf %150 : vector<1x128xf32>
    %152 = math.exp %151 : vector<1x128xf32>
    %cst_40 = arith.constant 1.000000e+00 : f32
    %153 = vector.broadcast %cst_40 : f32 to vector<1x128xf32>
    %154 = arith.addf %153, %152 : vector<1x128xf32>
    %155 = arith.divf %153, %154 : vector<1x128xf32>
    %156 = vector.extract_strided_slice %149 {offsets = [0, 128], sizes = [1, 128], strides = [1, 1]} : vector<1x512xf32> to vector<1x128xf32>
    %157 = arith.negf %156 : vector<1x128xf32>
    %158 = math.exp %157 : vector<1x128xf32>
    %cst_41 = arith.constant 1.000000e+00 : f32
    %159 = vector.broadcast %cst_41 : f32 to vector<1x128xf32>
    %160 = arith.addf %159, %158 : vector<1x128xf32>
    %161 = arith.divf %159, %160 : vector<1x128xf32>
    %162 = vector.extract_strided_slice %149 {offsets = [0, 256], sizes = [1, 128], strides = [1, 1]} : vector<1x512xf32> to vector<1x128xf32>
    %163 = math.tanh %162 : vector<1x128xf32>
    %164 = vector.extract_strided_slice %149 {offsets = [0, 384], sizes = [1, 128], strides = [1, 1]} : vector<1x512xf32> to vector<1x128xf32>
    %165 = arith.negf %164 : vector<1x128xf32>
    %166 = math.exp %165 : vector<1x128xf32>
    %cst_42 = arith.constant 1.000000e+00 : f32
    %167 = vector.broadcast %cst_42 : f32 to vector<1x128xf32>
    %168 = arith.addf %167, %166 : vector<1x128xf32>
    %169 = arith.divf %167, %168 : vector<1x128xf32>
    %170 = arith.mulf %161, %144 : vector<1x128xf32>
    %171 = arith.mulf %155, %163 : vector<1x128xf32>
    %172 = arith.addf %170, %171 : vector<1x128xf32>
    %173 = math.tanh %172 : vector<1x128xf32>
    %174 = arith.mulf %169, %173 : vector<1x128xf32>
    %c0_43 = arith.constant 0 : index
    %c0_44 = arith.constant 0 : index
    %175 = vector.load %arg2[%c0_43, %c0_44] : memref<128x512xf32, #tpu.memory_space<vmem>>, vector<128x512xf32>
    %cst_45 = arith.constant dense<0.000000e+00> : vector<1x512xf32>
    %176 = tpu.matmul %174, %175, %cst_45 {dimension_numbers = #tpu.dot_dimension_numbers<[1], [0], [0], [1], [0, 0, 1, 1], [], []>} : vector<1x128xf32>, vector<128x512xf32>, vector<1x512xf32> -> vector<1x512xf32>
    %177 = arith.addf %4, %176 : vector<1x512xf32>
    %178 = vector.extract_strided_slice %177 {offsets = [0, 0], sizes = [1, 128], strides = [1, 1]} : vector<1x512xf32> to vector<1x128xf32>
    %179 = arith.negf %178 : vector<1x128xf32>
    %180 = math.exp %179 : vector<1x128xf32>
    %cst_46 = arith.constant 1.000000e+00 : f32
    %181 = vector.broadcast %cst_46 : f32 to vector<1x128xf32>
    %182 = arith.addf %181, %180 : vector<1x128xf32>
    %183 = arith.divf %181, %182 : vector<1x128xf32>
    %184 = vector.extract_strided_slice %177 {offsets = [0, 128], sizes = [1, 128], strides = [1, 1]} : vector<1x512xf32> to vector<1x128xf32>
    %185 = arith.negf %184 : vector<1x128xf32>
    %186 = math.exp %185 : vector<1x128xf32>
    %cst_47 = arith.constant 1.000000e+00 : f32
    %187 = vector.broadcast %cst_47 : f32 to vector<1x128xf32>
    %188 = arith.addf %187, %186 : vector<1x128xf32>
    %189 = arith.divf %187, %188 : vector<1x128xf32>
    %190 = vector.extract_strided_slice %177 {offsets = [0, 256], sizes = [1, 128], strides = [1, 1]} : vector<1x512xf32> to vector<1x128xf32>
    %191 = math.tanh %190 : vector<1x128xf32>
    %192 = vector.extract_strided_slice %177 {offsets = [0, 384], sizes = [1, 128], strides = [1, 1]} : vector<1x512xf32> to vector<1x128xf32>
    %193 = arith.negf %192 : vector<1x128xf32>
    %194 = math.exp %193 : vector<1x128xf32>
    %cst_48 = arith.constant 1.000000e+00 : f32
    %195 = vector.broadcast %cst_48 : f32 to vector<1x128xf32>
    %196 = arith.addf %195, %194 : vector<1x128xf32>
    %197 = arith.divf %195, %196 : vector<1x128xf32>
    %198 = arith.mulf %189, %172 : vector<1x128xf32>
    %199 = arith.mulf %183, %191 : vector<1x128xf32>
    %200 = arith.addf %198, %199 : vector<1x128xf32>
    %201 = math.tanh %200 : vector<1x128xf32>
    %202 = arith.mulf %197, %201 : vector<1x128xf32>
    %c0_49 = arith.constant 0 : index
    %c0_50 = arith.constant 0 : index
    %203 = vector.load %arg2[%c0_49, %c0_50] : memref<128x512xf32, #tpu.memory_space<vmem>>, vector<128x512xf32>
    %cst_51 = arith.constant dense<0.000000e+00> : vector<1x512xf32>
    %204 = tpu.matmul %202, %203, %cst_51 {dimension_numbers = #tpu.dot_dimension_numbers<[1], [0], [0], [1], [0, 0, 1, 1], [], []>} : vector<1x128xf32>, vector<128x512xf32>, vector<1x512xf32> -> vector<1x512xf32>
    %205 = arith.addf %4, %204 : vector<1x512xf32>
    %206 = vector.extract_strided_slice %205 {offsets = [0, 0], sizes = [1, 128], strides = [1, 1]} : vector<1x512xf32> to vector<1x128xf32>
    %207 = arith.negf %206 : vector<1x128xf32>
    %208 = math.exp %207 : vector<1x128xf32>
    %cst_52 = arith.constant 1.000000e+00 : f32
    %209 = vector.broadcast %cst_52 : f32 to vector<1x128xf32>
    %210 = arith.addf %209, %208 : vector<1x128xf32>
    %211 = arith.divf %209, %210 : vector<1x128xf32>
    %212 = vector.extract_strided_slice %205 {offsets = [0, 128], sizes = [1, 128], strides = [1, 1]} : vector<1x512xf32> to vector<1x128xf32>
    %213 = arith.negf %212 : vector<1x128xf32>
    %214 = math.exp %213 : vector<1x128xf32>
    %cst_53 = arith.constant 1.000000e+00 : f32
    %215 = vector.broadcast %cst_53 : f32 to vector<1x128xf32>
    %216 = arith.addf %215, %214 : vector<1x128xf32>
    %217 = arith.divf %215, %216 : vector<1x128xf32>
    %218 = vector.extract_strided_slice %205 {offsets = [0, 256], sizes = [1, 128], strides = [1, 1]} : vector<1x512xf32> to vector<1x128xf32>
    %219 = math.tanh %218 : vector<1x128xf32>
    %220 = vector.extract_strided_slice %205 {offsets = [0, 384], sizes = [1, 128], strides = [1, 1]} : vector<1x512xf32> to vector<1x128xf32>
    %221 = arith.negf %220 : vector<1x128xf32>
    %222 = math.exp %221 : vector<1x128xf32>
    %cst_54 = arith.constant 1.000000e+00 : f32
    %223 = vector.broadcast %cst_54 : f32 to vector<1x128xf32>
    %224 = arith.addf %223, %222 : vector<1x128xf32>
    %225 = arith.divf %223, %224 : vector<1x128xf32>
    %226 = arith.mulf %217, %200 : vector<1x128xf32>
    %227 = arith.mulf %211, %219 : vector<1x128xf32>
    %228 = arith.addf %226, %227 : vector<1x128xf32>
    %229 = math.tanh %228 : vector<1x128xf32>
    %230 = arith.mulf %225, %229 : vector<1x128xf32>
    %231 = tpu.concatenate %34, %62, %90, %118, %146, %174, %202, %230 in 0 : vector<1x128xf32>, vector<1x128xf32>, vector<1x128xf32>, vector<1x128xf32>, vector<1x128xf32>, vector<1x128xf32>, vector<1x128xf32>, vector<1x128xf32> -> vector<8x128xf32>
    %c0_55 = arith.constant 0 : index
    %c0_56 = arith.constant 0 : index
    %232 = vector.load %arg4[%c0_55, %c0_56] : memref<128x1xf32, #tpu.memory_space<vmem>>, vector<128x1xf32>
    %cst_57 = arith.constant dense<0.000000e+00> : vector<8x1xf32>
    %233 = tpu.matmul %231, %232, %cst_57 {dimension_numbers = #tpu.dot_dimension_numbers<[1], [0], [0], [1], [0, 0, 1, 1], [], []>} : vector<8x128xf32>, vector<128x1xf32>, vector<8x1xf32> -> vector<8x1xf32>
    %c0_58 = arith.constant 0 : index
    %c0_59 = arith.constant 0 : index
    %234 = vector.load %arg5[%c0_58, %c0_59] : memref<1x1xf32, #tpu.memory_space<vmem>>, vector<1x1xf32>
    %235 = vector.broadcast %234 : vector<1x1xf32> to vector<8x1xf32>
    %236 = arith.addf %233, %235 : vector<8x1xf32>
    %c0_60 = arith.constant 0 : index
    %c0_61 = arith.constant 0 : index
    %237 = vector.load %arg6[%c0_60, %c0_61] : memref<8x1xf32, #tpu.memory_space<vmem>>, vector<8x1xf32>
    tpu.vector_store %arg6[%c0_60, %c0_61], %236 {strides = array<i32>} : memref<8x1xf32, #tpu.memory_space<vmem>>, vector<8x1xf32>,
    return
  }
}

</mosaic_0001>

<llo_original>
// kernel: tpu_custom_call.1
$region0: #{tpu_custom_call.1}
  #allocation0 [shape = 'u32[]', space=smem, size = 0x4, offset = 0x4, fixed_abs, tag = 'smem constant byte address 0x4 - core index']
  #allocation1 [shape = 'u32[144,128]{1,0:T(1,128)}', space=vmem, size = 0x12000, scoped, tag = 'internal scratch']
  #allocation2 [shape = 'f32[1,1]{1,0:T(1,128)S(1)}', space=vmem, size = 0x200, scoped, tag = 'scoped memory for tpu_custom_call.1']
  %s0 = inlined_call_operand.vmem [shape: f32[1,20], index: 0, kind: input, shape index: {}]
  %s1 = inlined_call_operand.vmem [shape: f32[20,512], index: 1, kind: input, shape index: {}]
  %s2 = inlined_call_operand.hbm [shape: f32[128,512], index: 2, kind: input, shape index: {}]
  %s3 = inlined_call_operand.vmem [shape: f32[1,512], index: 3, kind: input, shape index: {}]
  %s4 = inlined_call_operand.vmem [shape: f32[128,1], index: 4, kind: input, shape index: {}]
  %s5 = inlined_call_operand.<no memory space> [shape: f32[1,1], index: 5, kind: input, shape index: {}]
  %s6 = inlined_call_operand.vmem [shape: f32[8,1], index: 6, kind: output, shape index: {}]
  %s7 = sld [smem:[#allocation0]]
  $region38: #{tpu_custom_call.1} parent=0
    _
  %s9 = ssub.s32 1, %s7
  %s10 = scalar_select 0, %s9, %s7
  %v11 = vstv %s5
  %12 = vst [vmem:[#allocation2] sm:$0x1] %v11
  $region1: #{tpu_custom_call.1} parent=0
    #allocation3 [shape = 'u8[262144]{0}', space=vmem, size = 0x40000, scoped, tag = 'input window, operand 2, single buffered']
    #allocation4 [shape = 's32[1]{0}', space=sflag, size = 0x4, scoped, tag = 'scoped memory for tpu_custom_call.1']
    %13 = vsyncpa [#allocation4], 0
    // Predicated region
    $region2: #{tpu_custom_call.1} parent=1 // pred_check
      _
    $region3: #{tpu_custom_call.1} parent=1 // pred_check_branch
      %15 = sbr.rel (0) target = $region5
    $region4: #{tpu_custom_call.1} parent=1 // pred_region
      _
    $region5: #{tpu_custom_call.1} parent=1 // pred_fallthru
      _
    // Predicated region
    $region6: #{tpu_custom_call.1} parent=1 // pred_check
      _
    $region7: #{tpu_custom_call.1} parent=1 // pred_check_branch
      %17 = sbr.rel (0) target = $region9
    $region8: #{tpu_custom_call.1} parent=1 // pred_region
      _
    $region9: #{tpu_custom_call.1} parent=1 // pred_fallthru
      _
    // Predicated region
    $region10: #{tpu_custom_call.1} parent=1 // pred_check
      _
    $region11: #{tpu_custom_call.1} parent=1 // pred_check_branch
      %19 = sbr.rel (0) target = $region13
    $region12: #{tpu_custom_call.1} parent=1 // pred_region
      %s21 = ssub.s32 8192, 8192
      %22 = vsyncadd [#allocation4], %s21
      %s23 = sshll.u32 [#allocation3], 4
      %s24 = int_to_ptr.vmem [resolvable:$true] %s23
      %29 = dma.hbm_to_vmem [thread:$0]  %s2, 8192, %s24, [#allocation4], 512, 512, 32
    $region13: #{tpu_custom_call.1} parent=1 // pred_fallthru
      _
    // Predicated region
    $region14: #{tpu_custom_call.1} parent=1 // pred_check
      _
    $region15: #{tpu_custom_call.1} parent=1 // pred_check_branch
      %31 = sbr.rel (0) target = $region17
    $region16: #{tpu_custom_call.1} parent=1 // pred_region
      _
    $region17: #{tpu_custom_call.1} parent=1 // pred_fallthru
      _
    // Predicated region
    $region18: #{tpu_custom_call.1} parent=1 // pred_check
      _
    $region19: #{tpu_custom_call.1} parent=1 // pred_check_branch
      %33 = sbr.rel (0) target = $region21
    $region20: #{tpu_custom_call.1} parent=1 // pred_region
      _
    $region21: #{tpu_custom_call.1} parent=1 // pred_fallthru
      _
    // Predicated region
    $region22: #{tpu_custom_call.1} parent=1 // pred_check
      _
    $region23: #{tpu_custom_call.1} parent=1 // pred_check_branch
      %35 = sbr.rel (0) target = $region25
    $region24: #{tpu_custom_call.1} parent=1 // pred_region
      _
    $region25: #{tpu_custom_call.1} parent=1 // pred_fallthru
      _
    // Predicated region
    $region26: #{tpu_custom_call.1} parent=1 // pred_check
      _
    $region27: #{tpu_custom_call.1} parent=1 // pred_check_branch
      %37 = sbr.rel (0) target = $region29
    $region28: #{tpu_custom_call.1} parent=1 // pred_region
      %38 = dma.done [#allocation4], 8192
    $region29: #{tpu_custom_call.1} parent=1 // pred_fallthru
      _
    %v39 = vld [vmem:[%s0] sm:$0x1]
    %v40 = vld [vmem:[%s1] sm:$0xff]
    %v41 = vld [vmem:[%s1 + $0x8] sm:$0xff]
    %v42 = vld [vmem:[%s1 + $0x10] sm:$0xff]
    %v43 = vld [vmem:[%s1 + $0x18] sm:$0xff]
    %v44 = vld [vmem:[%s1 + $0x20] sm:$0xff]
    %v45 = vld [vmem:[%s1 + $0x28] sm:$0xff]
    %v46 = vld [vmem:[%s1 + $0x30] sm:$0xff]
    %v47 = vld [vmem:[%s1 + $0x38] sm:$0xff]
    %v48 = vld [vmem:[%s1 + $0x40] sm:$0xf]
    %v49 = vld [vmem:[%s1 + $0x48] sm:$0xf]
    %v50 = vld [vmem:[%s1 + $0x50] sm:$0xf]
    %v51 = vld [vmem:[%s1 + $0x58] sm:$0xf]
    %v52 = vld [vmem:[%s3] sm:$0xf]
    %v54 = vlaneseq
    %v55 = vshrl.u32 %v54, 7
    %v56 = vsub.s32 0, %v55
    %v57 = vrot.slane %v52, %v56
    %v58 = vlaneseq
    %v59 = vshrl.u32 %v58, 7
    %v60 = vsub.s32 1, %v59
    %v61 = vrot.slane %v52, %v60
    %v62 = vlaneseq
    %v63 = vshrl.u32 %v62, 7
    %v64 = vsub.s32 2, %v63
    %v65 = vrot.slane %v52, %v64
    %v66 = vlaneseq
    %v67 = vshrl.u32 %v66, 7
    %v68 = vsub.s32 3, %v67
    %v69 = vrot.slane %v52, %v68
    %vm74 = vcmask 162816
    %v76 = vsel %vm74, %v39, 0
    %vm78 = vcmask 1043456
    %v80 = vsel %vm78, %v48, 0
    %v83 = vsel %vm78, %v49, 0
    %v86 = vsel %vm78, %v50, 0
    %v89 = vsel %vm78, %v51, 0
    %91 = vmatprep.subr.mxu0 %v41
    %92 = vmatpush1.msra.mxu0 %v40
    %93 = vmatprep.subr.mxu0 %v45
    %94 = vmatpush1.msra.mxu0 %v44
    %95 = vmatprep.subr.mxu0 %v83
    %96 = vmatpush1.msra.mxu0 %v80
    %97 = vmatprep.subr.mxu0 0.0
    %98 = vmatpush1.msra.mxu0 0.0
    %99 = vmatprep.subr.mxu0 0.0
    %100 = vmatpush1.msra.mxu0 0.0
    %101 = vmatprep.subr.mxu0 0.0
    %102 = vmatpush1.msra.mxu0 0.0
    %103 = vmatprep.subr.mxu0 0.0
    %104 = vmatpush1.msra.mxu0 0.0
    %105 = vmatprep.subr.mxu0 0.0
    %106 = vmatpush1.msra.mxu0 0.0
    %107 = vmatprep.subr.mxu0 0.0
    %108 = vmatpush1.msra.mxu0 0.0
    %109 = vmatprep.subr.mxu0 0.0
    %110 = vmatpush1.msra.mxu0 0.0
    %111 = vmatprep.subr.mxu0 0.0
    %112 = vmatpush1.msra.mxu0 0.0
    %113 = vmatprep.subr.mxu0 0.0
    %114 = vmatpush1.msra.mxu0 0.0
    %115 = vmatprep.subr.mxu0 0.0
    %116 = vmatpush1.msra.mxu0 0.0
    %117 = vmatprep.subr.mxu0 0.0
    %118 = vmatpush1.msra.mxu0 0.0
    %119 = vmatprep.subr.mxu0 0.0
    %120 = vmatpush1.msra.mxu0 0.0
    %121 = vmatprep.subr.mxu0 0.0
    %122 = vmatpush1.msra.mxu0 0.0
    %123 = vmatprep.subr.mxu0 0.0
    %124 = vmatpush1.msra.mxu0 0.0
    %125 = vmatprep.subr.mxu0 0.0
    %126 = vmatpush1.msra.mxu0 0.0
    %127 = vmatprep.subr.mxu0 0.0
    %128 = vmatpush1.msra.mxu0 0.0
    %129 = vmatprep.subr.mxu0 0.0
    %130 = vmatpush1.msra.mxu0 0.0
    %131 = vmatprep.subr.mxu0 0.0
    %132 = vmatpush1.msra.mxu0 0.0
    %133 = vmatprep.subr.mxu0 0.0
    %134 = vmatpush1.msra.mxu0 0.0
    %135 = vmatprep.subr.mxu0 0.0
    %136 = vmatpush1.msra.mxu0 0.0
    %137 = vmatprep.subr.mxu0 0.0
    %138 = vmatpush1.msra.mxu0 0.0
    %139 = vmatprep.subr.mxu0 0.0
    %140 = vmatpush1.msra.mxu0 0.0
    %141 = vmatprep.subr.mxu0 0.0
    %142 = vmatpush1.msra.mxu0 0.0
    %143 = vmatprep.subr.mxu0 0.0
    %144 = vmatpush1.msra.mxu0 0.0
    %145 = vmatprep.subr.mxu0 0.0
    %146 = vmatpush1.msra.mxu0 0.0
    %147 = vmatprep.subr.mxu0 0.0
    %148 = vmatpush1.msra.mxu0 0.0
    %149 = vmatprep.subr.mxu0 0.0
    %150 = vmatpush1.msra.mxu0 0.0
    %151 = vmatprep.subr.mxu0 0.0
    %152 = vmatpush1.msra.mxu0 0.0
    %153 = vmatprep.subr.mxu0 0.0
    %154 = vmatpush1.msra.mxu0 0.0
    %155 = vmatprep.mubr.f32.mxu0 0.0
    %156 = vmatmul.mubr.f32.gmra.mrb[0].mxu0 %v76
    %v157 = vpop.f32.mrb[0].mxu0
    %v158 = vadd.f32 %v57, %v157
    %v159 = vpop.f32.mrb[0].mxu0
    %v160 = vadd.f32 %v61, %v159
    %161 = vdwg.mxu0
    %162 = vmatprep.subr.mxu0 %v43
    %163 = vmatpush1.msra.mxu0 %v42
    %164 = vmatprep.subr.mxu0 %v47
    %165 = vmatpush1.msra.mxu0 %v46
    %166 = vmatprep.subr.mxu0 %v89
    %167 = vmatpush1.msra.mxu0 %v86
    %168 = vmatprep.subr.mxu0 0.0
    %169 = vmatpush1.msra.mxu0 0.0
    %170 = vmatprep.subr.mxu0 0.0
    %171 = vmatpush1.msra.mxu0 0.0
    %172 = vmatprep.subr.mxu0 0.0
    %173 = vmatpush1.msra.mxu0 0.0
    %174 = vmatprep.subr.mxu0 0.0
    %175 = vmatpush1.msra.mxu0 0.0
    %176 = vmatprep.subr.mxu0 0.0
    %177 = vmatpush1.msra.mxu0 0.0
    %178 = vmatprep.subr.mxu0 0.0
    %179 = vmatpush1.msra.mxu0 0.0
    %180 = vmatprep.subr.mxu0 0.0
    %181 = vmatpush1.msra.mxu0 0.0
    %182 = vmatprep.subr.mxu0 0.0
    %183 = vmatpush1.msra.mxu0 0.0
    %184 = vmatprep.subr.mxu0 0.0
    %185 = vmatpush1.msra.mxu0 0.0
    %186 = vmatprep.subr.mxu0 0.0
    %187 = vmatpush1.msra.mxu0 0.0
    %188 = vmatprep.subr.mxu0 0.0
    %189 = vmatpush1.msra.mxu0 0.0
    %190 = vmatprep.subr.mxu0 0.0
    %191 = vmatpush1.msra.mxu0 0.0
    %192 = vmatprep.subr.mxu0 0.0
    %193 = vmatpush1.msra.mxu0 0.0
    %194 = vmatprep.subr.mxu0 0.0
    %195 = vmatpush1.msra.mxu0 0.0
    %196 = vmatprep.subr.mxu0 0.0
    %197 = vmatpush1.msra.mxu0 0.0
    %198 = vmatprep.subr.mxu0 0.0
    %199 = vmatpush1.msra.mxu0 0.0
    %200 = vmatprep.subr.mxu0 0.0
    %201 = vmatpush1.msra.mxu0 0.0
    %202 = vmatprep.subr.mxu0 0.0
    %203 = vmatpush1.msra.mxu0 0.0
    %204 = vmatprep.subr.mxu0 0.0
    %205 = vmatpush1.msra.mxu0 0.0
    %206 = vmatprep.subr.mxu0 0.0
    %207 = vmatpush1.msra.mxu0 0.0
    %208 = vmatprep.subr.mxu0 0.0
    %209 = vmatpush1.msra.mxu0 0.0
    %210 = vmatprep.subr.mxu0 0.0
    %211 = vmatpush1.msra.mxu0 0.0
    %212 = vmatprep.subr.mxu0 0.0
    %213 = vmatpush1.msra.mxu0 0.0
    %214 = vmatprep.subr.mxu0 0.0
    %215 = vmatpush1.msra.mxu0 0.0
    %216 = vmatprep.subr.mxu0 0.0
    %217 = vmatpush1.msra.mxu0 0.0
    %218 = vmatprep.subr.mxu0 0.0
    %219 = vmatpush1.msra.mxu0 0.0
    %220 = vmatprep.subr.mxu0 0.0
    %221 = vmatpush1.msra.mxu0 0.0
    %222 = vmatprep.subr.mxu0 0.0
    %223 = vmatpush1.msra.mxu0 0.0
    %224 = vmatprep.subr.mxu0 0.0
    %225 = vmatpush1.msra.mxu0 0.0
    %226 = vmatprep.mubr.f32.mxu0 0.0
    %227 = vmatmul.mubr.f32.gmra.mrb[0].mxu0 %v76
    %v228 = vpop.f32.mrb[0].mxu0
    %v229 = vadd.f32 %v65, %v228
    %v230 = vpop.f32.mrb[0].mxu0
    %v231 = vadd.f32 %v69, %v230
    %232 = vdwg.mxu0
    %v233 = vld [vmem:[#allocation3] sm:$0xff]
    %v234 = vld [vmem:[#allocation3 + $0x8] sm:$0xff]
    %v235 = vld [vmem:[#allocation3 + $0x10] sm:$0xff]
    %v236 = vld [vmem:[#allocation3 + $0x18] sm:$0xff]
    %v237 = vld [vmem:[#allocation3 + $0x20] sm:$0xff]
    %v238 = vld [vmem:[#allocation3 + $0x28] sm:$0xff]
    %v239 = vld [vmem:[#allocation3 + $0x30] sm:$0xff]
    %v240 = vld [vmem:[#allocation3 + $0x38] sm:$0xff]
    %v241 = vld [vmem:[#allocation3 + $0x40] sm:$0xff]
    %v242 = vld [vmem:[#allocation3 + $0x48] sm:$0xff]
    %v243 = vld [vmem:[#allocation3 + $0x50] sm:$0xff]
    %v244 = vld [vmem:[#allocation3 + $0x58] sm:$0xff]
    %v245 = vld [vmem:[#allocation3 + $0x60] sm:$0xff]
    %v246 = vld [vmem:[#allocation3 + $0x68] sm:$0xff]
    %v247 = vld [vmem:[#allocation3 + $0x70] sm:$0xff]
    %v248 = vld [vmem:[#allocation3 + $0x78] sm:$0xff]
    %v249 = vld [vmem:[#allocation3 + $0x80] sm:$0xff]
    %v250 = vld [vmem:[#allocation3 + $0x88] sm:$0xff]
    %v251 = vld [vmem:[#allocation3 + $0x90] sm:$0xff]
    %v252 = vld [vmem:[#allocation3 + $0x98] sm:$0xff]
    %v253 = vld [vmem:[#allocation3 + $0xa0] sm:$0xff]
    %v254 = vld [vmem:[#allocation3 + $0xa8] sm:$0xff]
    %v255 = vld [vmem:[#allocation3 + $0xb0] sm:$0xff]
    %v256 = vld [vmem:[#allocation3 + $0xb8] sm:$0xff]
    %v257 = vld [vmem:[#allocation3 + $0xc0] sm:$0xff]
    %v258 = vld [vmem:[#allocation3 + $0xc8] sm:$0xff]
    %v259 = vld [vmem:[#allocation3 + $0xd0] sm:$0xff]
    %v260 = vld [vmem:[#allocation3 + $0xd8] sm:$0xff]
    %v261 = vld [vmem:[#allocation3 + $0xe0] sm:$0xff]
    %v262 = vld [vmem:[#allocation3 + $0xe8] sm:$0xff]
    %v263 = vld [vmem:[#allocation3 + $0xf0] sm:$0xff]
    %v264 = vld [vmem:[#allocation3 + $0xf8] sm:$0xff]
    %v265 = vld [vmem:[#allocation3 + $0x100] sm:$0xff]
    %v266 = vld [vmem:[#allocation3 + $0x108] sm:$0xff]
    %v267 = vld [vmem:[#allocation3 + $0x110] sm:$0xff]
    %v268 = vld [vmem:[#allocation3 + $0x118] sm:$0xff]
    %v269 = vld [vmem:[#allocation3 + $0x120] sm:$0xff]
    %v270 = vld [vmem:[#allocation3 + $0x128] sm:$0xff]
    %v271 = vld [vmem:[#allocation3 + $0x130] sm:$0xff]
    %v272 = vld [vmem:[#allocation3 + $0x138] sm:$0xff]
    %v273 = vld [vmem:[#allocation3 + $0x140] sm:$0xff]
    %v274 = vld [vmem:[#allocation3 + $0x148] sm:$0xff]
    %v275 = vld [vmem:[#allocation3 + $0x150] sm:$0xff]
    %v276 = vld [vmem:[#allocation3 + $0x158] sm:$0xff]
    %v277 = vld [vmem:[#allocation3 + $0x160] sm:$0xff]
    %v278 = vld [vmem:[#allocation3 + $0x168] sm:$0xff]
    %v279 = vld [vmem:[#allocation3 + $0x170] sm:$0xff]
    %v280 = vld [vmem:[#allocation3 + $0x178] sm:$0xff]
    %v281 = vld [vmem:[#allocation3 + $0x180] sm:$0xff]
    %v282 = vld [vmem:[#allocation3 + $0x188] sm:$0xff]
    %v283 = vld [vmem:[#allocation3 + $0x190] sm:$0xff]
    %v284 = vld [vmem:[#allocation3 + $0x198] sm:$0xff]
    %v285 = vld [vmem:[#allocation3 + $0x1a0] sm:$0xff]
    %v286 = vld [vmem:[#allocation3 + $0x1a8] sm:$0xff]
    %v287 = vld [vmem:[#allocation3 + $0x1b0] sm:$0xff]
    %v288 = vld [vmem:[#allocation3 + $0x1b8] sm:$0xff]
    %v289 = vld [vmem:[#allocation3 + $0x1c0] sm:$0xff]
    %v290 = vld [vmem:[#allocation3 + $0x1c8] sm:$0xff]
    %v291 = vld [vmem:[#allocation3 + $0x1d0] sm:$0xff]
    %v292 = vld [vmem:[#allocation3 + $0x1d8] sm:$0xff]
    %v293 = vld [vmem:[#allocation3 + $0x1e0] sm:$0xff]
    %v294 = vld [vmem:[#allocation3 + $0x1e8] sm:$0xff]
    %v295 = vld [vmem:[#allocation3 + $0x1f0] sm:$0xff]
    %v296 = vld [vmem:[#allocation3 + $0x1f8] sm:$0xff]
    %297 = vmatprep.subr.mxu0 %v234
    %298 = vmatpush1.msra.mxu0 %v233
    %299 = vmatprep.subr.mxu0 %v238
    %300 = vmatpush1.msra.mxu0 %v237
    %301 = vmatprep.subr.mxu0 %v242
    %302 = vmatpush1.msra.mxu0 %v241
    %303 = vmatprep.subr.mxu0 %v246
    %304 = vmatpush1.msra.mxu0 %v245
    %305 = vmatprep.subr.mxu0 %v250
    %306 = vmatpush1.msra.mxu0 %v249
    %307 = vmatprep.subr.mxu0 %v254
    %308 = vmatpush1.msra.mxu0 %v253
    %309 = vmatprep.subr.mxu0 %v258
    %310 = vmatpush1.msra.mxu0 %v257
    %311 = vmatprep.subr.mxu0 %v262
    %312 = vmatpush1.msra.mxu0 %v261
    %313 = vmatprep.subr.mxu0 %v266
    %314 = vmatpush1.msra.mxu0 %v265
    %315 = vmatprep.subr.mxu0 %v270
    %316 = vmatpush1.msra.mxu0 %v269
    %317 = vmatprep.subr.mxu0 %v274
    %318 = vmatpush1.msra.mxu0 %v273
    %319 = vmatprep.subr.mxu0 %v278
    %320 = vmatpush1.msra.mxu0 %v277
    %321 = vmatprep.subr.mxu0 %v282
    %322 = vmatpush1.msra.mxu0 %v281
    %323 = vmatprep.subr.mxu0 %v286
    %324 = vmatpush1.msra.mxu0 %v285
    %325 = vmatprep.subr.mxu0 %v290
    %326 = vmatpush1.msra.mxu0 %v289
    %327 = vmatprep.subr.mxu0 %v294
    %328 = vmatpush1.msra.mxu0 %v293
    %329 = vmatprep.subr.mxu0 0.0
    %330 = vmatpush1.msra.mxu0 0.0
    %331 = vmatprep.subr.mxu0 0.0
    %332 = vmatpush1.msra.mxu0 0.0
    %333 = vmatprep.subr.mxu0 0.0
    %334 = vmatpush1.msra.mxu0 0.0
    %335 = vmatprep.subr.mxu0 0.0
    %336 = vmatpush1.msra.mxu0 0.0
    %337 = vmatprep.subr.mxu0 0.0
    %338 = vmatpush1.msra.mxu0 0.0
    %339 = vmatprep.subr.mxu0 0.0
    %340 = vmatpush1.msra.mxu0 0.0
    %341 = vmatprep.subr.mxu0 0.0
    %342 = vmatpush1.msra.mxu0 0.0
    %343 = vmatprep.subr.mxu0 0.0
    %344 = vmatpush1.msra.mxu0 0.0
    %345 = vmatprep.subr.mxu0 0.0
    %346 = vmatpush1.msra.mxu0 0.0
    %347 = vmatprep.subr.mxu0 0.0
    %348 = vmatpush1.msra.mxu0 0.0
    %349 = vmatprep.subr.mxu0 0.0
    %350 = vmatpush1.msra.mxu0 0.0
    %351 = vmatprep.subr.mxu0 0.0
    %352 = vmatpush1.msra.mxu0 0.0
    %353 = vmatprep.subr.mxu0 0.0
    %354 = vmatpush1.msra.mxu0 0.0
    %355 = vmatprep.subr.mxu0 0.0
    %356 = vmatpush1.msra.mxu0 0.0
    %357 = vmatprep.subr.mxu0 0.0
    %358 = vmatpush1.msra.mxu0 0.0
    %359 = vmatprep.subr.mxu0 0.0
    %360 = vmatpush1.msra.mxu0 0.0
    %361 = vmatprep.mubr.f32.mxu0 0.0
    %362 = vmatmul.mubr.f32.gmra.mrb[0].mxu0 0.0
    %v363 = vpop.f32.mrb[0].mxu0
    %v364 = vadd.f32 0.0, %v363
    %v365 = vpop.f32.mrb[0].mxu0
    %v366 = vadd.f32 0.0, %v365
    %367 = vdwg.mxu0
    %368 = vmatprep.subr.mxu0 %v236
    %369 = vmatpush1.msra.mxu0 %v235
    %370 = vmatprep.subr.mxu0 %v240
    %371 = vmatpush1.msra.mxu0 %v239
    %372 = vmatprep.subr.mxu0 %v244
    %373 = vmatpush1.msra.mxu0 %v243
    %374 = vmatprep.subr.mxu0 %v248
    %375 = vmatpush1.msra.mxu0 %v247
    %376 = vmatprep.subr.mxu0 %v252
    %377 = vmatpush1.msra.mxu0 %v251
    %378 = vmatprep.subr.mxu0 %v256
    %379 = vmatpush1.msra.mxu0 %v255
    %380 = vmatprep.subr.mxu0 %v260
    %381 = vmatpush1.msra.mxu0 %v259
    %382 = vmatprep.subr.mxu0 %v264
    %383 = vmatpush1.msra.mxu0 %v263
    %384 = vmatprep.subr.mxu0 %v268
    %385 = vmatpush1.msra.mxu0 %v267
    %386 = vmatprep.subr.mxu0 %v272
    %387 = vmatpush1.msra.mxu0 %v271
    %388 = vmatprep.subr.mxu0 %v276
    %389 = vmatpush1.msra.mxu0 %v275
    %390 = vmatprep.subr.mxu0 %v280
    %391 = vmatpush1.msra.mxu0 %v279
    %392 = vmatprep.subr.mxu0 %v284
    %393 = vmatpush1.msra.mxu0 %v283
    %394 = vmatprep.subr.mxu0 %v288
    %395 = vmatpush1.msra.mxu0 %v287
    %396 = vmatprep.subr.mxu0 %v292
    %397 = vmatpush1.msra.mxu0 %v291
    %398 = vmatprep.subr.mxu0 %v296
    %399 = vmatpush1.msra.mxu0 %v295
    %400 = vmatprep.subr.mxu0 0.0
    %401 = vmatpush1.msra.mxu0 0.0
    %402 = vmatprep.subr.mxu0 0.0
    %403 = vmatpush1.msra.mxu0 0.0
    %404 = vmatprep.subr.mxu0 0.0
    %405 = vmatpush1.msra.mxu0 0.0
    %406 = vmatprep.subr.mxu0 0.0
    %407 = vmatpush1.msra.mxu0 0.0
    %408 = vmatprep.subr.mxu0 0.0
    %409 = vmatpush1.msra.mxu0 0.0
    %410 = vmatprep.subr.mxu0 0.0
    %411 = vmatpush1.msra.mxu0 0.0
    %412 = vmatprep.subr.mxu0 0.0
    %413 = vmatpush1.msra.mxu0 0.0
    %414 = vmatprep.subr.mxu0 0.0
    %415 = vmatpush1.msra.mxu0 0.0
    %416 = vmatprep.subr.mxu0 0.0
    %417 = vmatpush1.msra.mxu0 0.0
    %418 = vmatprep.subr.mxu0 0.0
    %419 = vmatpush1.msra.mxu0 0.0
    %420 = vmatprep.subr.mxu0 0.0
    %421 = vmatpush1.msra.mxu0 0.0
    %422 = vmatprep.subr.mxu0 0.0
    %423 = vmatpush1.msra.mxu0 0.0
    %424 = vmatprep.subr.mxu0 0.0
    %425 = vmatpush1.msra.mxu0 0.0
    %426 = vmatprep.subr.mxu0 0.0
    %427 = vmatpush1.msra.mxu0 0.0
    %428 = vmatprep.subr.mxu0 0.0
    %429 = vmatpush1.msra.mxu0 0.0
    %430 = vmatprep.subr.mxu0 0.0
    %431 = vmatpush1.msra.mxu0 0.0
    %432 = vmatprep.mubr.f32.mxu0 0.0
    %433 = vmatmul.mubr.f32.gmra.mrb[0].mxu0 0.0
    %v434 = vpop.f32.mrb[0].mxu0
    %v435 = vadd.f32 0.0, %v434
    %v436 = vpop.f32.mrb[0].mxu0
    %v437 = vadd.f32 0.0, %v436
    %438 = vdwg.mxu0
    %v439 = vadd.f32 %v158, %v364
    %v440 = vadd.f32 %v160, %v366
    %v441 = vadd.f32 %v229, %v435
    %v442 = vadd.f32 %v231, %v437
    %v443 = vxor.u32 %v439, 2147483648
    %v444 = vmul.f32 %v443, 1.442695
    %v445 = vpow.pop %v444
    %v446 = vadd.f32 %v445, 1.0
    %v447 = vrcp.pop %v446
    %v448 = vmul.f32 1.0, %v447
    %v449 = vxor.u32 %v440, 2147483648
    %v450 = vmul.f32 %v449, 1.442695
    %v451 = vpow.pop %v450
    %v452 = vadd.f32 %v451, 1.0
    %v453 = vrcp.pop %v452
    %v454 = vmul.f32 1.0, %v453
    %v455 = vtanh.pop %v441
    %v456 = vxor.u32 %v442, 2147483648
    %v457 = vmul.f32 %v456, 1.442695
    %v458 = vpow.pop %v457
    %v459 = vadd.f32 %v458, 1.0
    %v460 = vrcp.pop %v459
    %v461 = vmul.f32 1.0, %v460
    %v462 = vmul.f32 %v454, 0.0
    %v463 = vmul.f32 %v448, %v455
    %v464 = vadd.f32 %v462, %v463
    %v465 = vtanh.pop %v464
    %v466 = vmul.f32 %v461, %v465
    %467 = vmatprep.subr.mxu0 %v234
    %468 = vmatpush1.msra.mxu0 %v233
    %469 = vmatprep.subr.mxu0 %v238
    %470 = vmatpush1.msra.mxu0 %v237
    %471 = vmatprep.subr.mxu0 %v242
    %472 = vmatpush1.msra.mxu0 %v241
    %473 = vmatprep.subr.mxu0 %v246
    %474 = vmatpush1.msra.mxu0 %v245
    %475 = vmatprep.subr.mxu0 %v250
    %476 = vmatpush1.msra.mxu0 %v249
    %477 = vmatprep.subr.mxu0 %v254
    %478 = vmatpush1.msra.mxu0 %v253
    %479 = vmatprep.subr.mxu0 %v258
    %480 = vmatpush1.msra.mxu0 %v257
    %481 = vmatprep.subr.mxu0 %v262
    %482 = vmatpush1.msra.mxu0 %v261
    %483 = vmatprep.subr.mxu0 %v266
    %484 = vmatpush1.msra.mxu0 %v265
    %485 = vmatprep.subr.mxu0 %v270
    %486 = vmatpush1.msra.mxu0 %v269
    %487 = vmatprep.subr.mxu0 %v274
    %488 = vmatpush1.msra.mxu0 %v273
    %489 = vmatprep.subr.mxu0 %v278
    %490 = vmatpush1.msra.mxu0 %v277
    %491 = vmatprep.subr.mxu0 %v282
    %492 = vmatpush1.msra.mxu0 %v281
    %493 = vmatprep.subr.mxu0 %v286
    %494 = vmatpush1.msra.mxu0 %v285
    %495 = vmatprep.subr.mxu0 %v290
    %496 = vmatpush1.msra.mxu0 %v289
    %497 = vmatprep.subr.mxu0 %v294
    %498 = vmatpush1.msra.mxu0 %v293
    %499 = vmatprep.subr.mxu0 0.0
    %500 = vmatpush1.msra.mxu0 0.0
    %501 = vmatprep.subr.mxu0 0.0
    %502 = vmatpush1.msra.mxu0 0.0
    %503 = vmatprep.subr.mxu0 0.0
    %504 = vmatpush1.msra.mxu0 0.0
    %505 = vmatprep.subr.mxu0 0.0
    %506 = vmatpush1.msra.mxu0 0.0
    %507 = vmatprep.subr.mxu0 0.0
    %508 = vmatpush1.msra.mxu0 0.0
    %509 = vmatprep.subr.mxu0 0.0
    %510 = vmatpush1.msra.mxu0 0.0
    %511 = vmatprep.subr.mxu0 0.0
    %512 = vmatpush1.msra.mxu0 0.0
    %513 = vmatprep.subr.mxu0 0.0
    %514 = vmatpush1.msra.mxu0 0.0
    %515 = vmatprep.subr.mxu0 0.0
    %516 = vmatpush1.msra.mxu0 0.0
    %517 = vmatprep.subr.mxu0 0.0
    %518 = vmatpush1.msra.mxu0 0.0
    %519 = vmatprep.subr.mxu0 0.0
    %520 = vmatpush1.msra.mxu0 0.0
    %521 = vmatprep.subr.mxu0 0.0
    %522 = vmatpush1.msra.mxu0 0.0
    %523 = vmatprep.subr.mxu0 0.0
    %524 = vmatpush1.msra.mxu0 0.0
    %525 = vmatprep.subr.mxu0 0.0
    %526 = vmatpush1.msra.mxu0 0.0
    %527 = vmatprep.subr.mxu0 0.0
    %528 = vmatpush1.msra.mxu0 0.0
    %529 = vmatprep.subr.mxu0 0.0
    %530 = vmatpush1.msra.mxu0 0.0
    %531 = vmatprep.mubr.f32.mxu0 0.0
    %532 = vmatmul.mubr.f32.gmra.mrb[0].mxu0 %v466
    %v533 = vpop.f32.mrb[0].mxu0
    %v534 = vadd.f32 0.0, %v533
    %v535 = vpop.f32.mrb[0].mxu0
    %v536 = vadd.f32 0.0, %v535
    %537 = vdwg.mxu0
    %538 = vmatprep.subr.mxu0 %v236
    %539 = vmatpush1.msra.mxu0 %v235
    %540 = vmatprep.subr.mxu0 %v240
    %541 = vmatpush1.msra.mxu0 %v239
    %542 = vmatprep.subr.mxu0 %v244
    %543 = vmatpush1.msra.mxu0 %v243
    %544 = vmatprep.subr.mxu0 %v248
    %545 = vmatpush1.msra.mxu0 %v247
    %546 = vmatprep.subr.mxu0 %v252
    %547 = vmatpush1.msra.mxu0 %v251
    %548 = vmatprep.subr.mxu0 %v256
    %549 = vmatpush1.msra.mxu0 %v255
    %550 = vmatprep.subr.mxu0 %v260
    %551 = vmatpush1.msra.mxu0 %v259
    %552 = vmatprep.subr.mxu0 %v264
    %553 = vmatpush1.msra.mxu0 %v263
    %554 = vmatprep.subr.mxu0 %v268
    %555 = vmatpush1.msra.mxu0 %v267
    %556 = vmatprep.subr.mxu0 %v272
    %557 = vmatpush1.msra.mxu0 %v271
    %558 = vmatprep.subr.mxu0 %v276
    %559 = vmatpush1.msra.mxu0 %v275
    %560 = vmatprep.subr.mxu0 %v280
    %561 = vmatpush1.msra.mxu0 %v279
    %562 = vmatprep.subr.mxu0 %v284
    %563 = vmatpush1.msra.mxu0 %v283
    %564 = vmatprep.subr.mxu0 %v288
    %565 = vmatpush1.msra.mxu0 %v287
    %566 = vmatprep.subr.mxu0 %v292
    %567 = vmatpush1.msra.mxu0 %v291
    %568 = vmatprep.subr.mxu0 %v296
    %569 = vmatpush1.msra.mxu0 %v295
    %570 = vmatprep.subr.mxu0 0.0
    %571 = vmatpush1.msra.mxu0 0.0
    %572 = vmatprep.subr.mxu0 0.0
    %573 = vmatpush1.msra.mxu0 0.0
    %574 = vmatprep.subr.mxu0 0.0
    %575 = vmatpush1.msra.mxu0 0.0
    %576 = vmatprep.subr.mxu0 0.0
    %577 = vmatpush1.msra.mxu0 0.0
    %578 = vmatprep.subr.mxu0 0.0
    %579 = vmatpush1.msra.mxu0 0.0
    %580 = vmatprep.subr.mxu0 0.0
    %581 = vmatpush1.msra.mxu0 0.0
    %582 = vmatprep.subr.mxu0 0.0
    %583 = vmatpush1.msra.mxu0 0.0
    %584 = vmatprep.subr.mxu0 0.0
    %585 = vmatpush1.msra.mxu0 0.0
    %586 = vmatprep.subr.mxu0 0.0
    %587 = vmatpush1.msra.mxu0 0.0
    %588 = vmatprep.subr.mxu0 0.0
    %589 = vmatpush1.msra.mxu0 0.0
    %590 = vmatprep.subr.mxu0 0.0
    %591 = vmatpush1.msra.mxu0 0.0
    %592 = vmatprep.subr.mxu0 0.0
    %593 = vmatpush1.msra.mxu0 0.0
    %594 = vmatprep.subr.mxu0 0.0
    %595 = vmatpush1.msra.mxu0 0.0
    %596 = vmatprep.subr.mxu0 0.0
    %597 = vmatpush1.msra.mxu0 0.0
    %598 = vmatprep.subr.mxu0 0.0
    %599 = vmatpush1.msra.mxu0 0.0
    %600 = vmatprep.subr.mxu0 0.0
    %601 = vmatpush1.msra.mxu0 0.0
    %602 = vmatprep.mubr.f32.mxu0 0.0
    %603 = vmatmul.mubr.f32.gmra.mrb[0].mxu0 %v466
    %v604 = vpop.f32.mrb[0].mxu0
    %v605 = vadd.f32 0.0, %v604
    %v606 = vpop.f32.mrb[0].mxu0
    %v607 = vadd.f32 0.0, %v606
    %608 = vdwg.mxu0
    %v609 = vadd.f32 %v158, %v534
    %v610 = vadd.f32 %v160, %v536
    %v611 = vadd.f32 %v229, %v605
    %v612 = vadd.f32 %v231, %v607
    %v613 = vxor.u32 %v609, 2147483648
    %v614 = vmul.f32 %v613, 1.442695
    %v615 = vpow.pop %v614
    %v616 = vadd.f32 %v615, 1.0
    %v617 = vrcp.pop %v616
    %v618 = vmul.f32 1.0, %v617
    %v619 = vxor.u32 %v610, 2147483648
    %v620 = vmul.f32 %v619, 1.442695
    %v621 = vpow.pop %v620
    %v622 = vadd.f32 %v621, 1.0
    %v623 = vrcp.pop %v622
    %v624 = vmul.f32 1.0, %v623
    %v625 = vtanh.pop %v611
    %v626 = vxor.u32 %v612, 2147483648
    %v627 = vmul.f32 %v626, 1.442695
    %v628 = vpow.pop %v627
    %v629 = vadd.f32 %v628, 1.0
    %v630 = vrcp.pop %v629
    %v631 = vmul.f32 1.0, %v630
    %v632 = vmul.f32 %v624, %v464
    %v633 = vmul.f32 %v618, %v625
    %v634 = vadd.f32 %v632, %v633
    %v635 = vtanh.pop %v634
    %v636 = vmul.f32 %v631, %v635
    %637 = vmatprep.subr.mxu0 %v234
    %638 = vmatpush1.msra.mxu0 %v233
    %639 = vmatprep.subr.mxu0 %v238
    %640 = vmatpush1.msra.mxu0 %v237
    %641 = vmatprep.subr.mxu0 %v242
    %642 = vmatpush1.msra.mxu0 %v241
    %643 = vmatprep.subr.mxu0 %v246
    %644 = vmatpush1.msra.mxu0 %v245
    %645 = vmatprep.subr.mxu0 %v250
    %646 = vmatpush1.msra.mxu0 %v249
    %647 = vmatprep.subr.mxu0 %v254
    %648 = vmatpush1.msra.mxu0 %v253
    %649 = vmatprep.subr.mxu0 %v258
    %650 = vmatpush1.msra.mxu0 %v257
    %651 = vmatprep.subr.mxu0 %v262
    %652 = vmatpush1.msra.mxu0 %v261
    %653 = vmatprep.subr.mxu0 %v266
    %654 = vmatpush1.msra.mxu0 %v265
    %655 = vmatprep.subr.mxu0 %v270
    %656 = vmatpush1.msra.mxu0 %v269
    %657 = vmatprep.subr.mxu0 %v274
    %658 = vmatpush1.msra.mxu0 %v273
    %659 = vmatprep.subr.mxu0 %v278
    %660 = vmatpush1.msra.mxu0 %v277
    %661 = vmatprep.subr.mxu0 %v282
    %662 = vmatpush1.msra.mxu0 %v281
    %663 = vmatprep.subr.mxu0 %v286
    %664 = vmatpush1.msra.mxu0 %v285
    %665 = vmatprep.subr.mxu0 %v290
    %666 = vmatpush1.msra.mxu0 %v289
    %667 = vmatprep.subr.mxu0 %v294
    %668 = vmatpush1.msra.mxu0 %v293
    %669 = vmatprep.subr.mxu0 0.0
    %670 = vmatpush1.msra.mxu0 0.0
    %671 = vmatprep.subr.mxu0 0.0
    %672 = vmatpush1.msra.mxu0 0.0
    %673 = vmatprep.subr.mxu0 0.0
    %674 = vmatpush1.msra.mxu0 0.0
    %675 = vmatprep.subr.mxu0 0.0
    %676 = vmatpush1.msra.mxu0 0.0
    %677 = vmatprep.subr.mxu0 0.0
    %678 = vmatpush1.msra.mxu0 0.0
    %679 = vmatprep.subr.mxu0 0.0
    %680 = vmatpush1.msra.mxu0 0.0
    %681 = vmatprep.subr.mxu0 0.0
    %682 = vmatpush1.msra.mxu0 0.0
    %683 = vmatprep.subr.mxu0 0.0
    %684 = vmatpush1.msra.mxu0 0.0
    %685 = vmatprep.subr.mxu0 0.0
    %686 = vmatpush1.msra.mxu0 0.0
    %687 = vmatprep.subr.mxu0 0.0
    %688 = vmatpush1.msra.mxu0 0.0
    %689 = vmatprep.subr.mxu0 0.0
    %690 = vmatpush1.msra.mxu0 0.0
    %691 = vmatprep.subr.mxu0 0.0
    %692 = vmatpush1.msra.mxu0 0.0
    %693 = vmatprep.subr.mxu0 0.0
    %694 = vmatpush1.msra.mxu0 0.0
    %695 = vmatprep.subr.mxu0 0.0
    %696 = vmatpush1.msra.mxu0 0.0
    %697 = vmatprep.subr.mxu0 0.0
    %698 = vmatpush1.msra.mxu0 0.0
    %699 = vmatprep.subr.mxu0 0.0
    %700 = vmatpush1.msra.mxu0 0.0
    %701 = vmatprep.mubr.f32.mxu0 0.0
    %702 = vmatmul.mubr.f32.gmra.mrb[0].mxu0 %v636
    %v703 = vpop.f32.mrb[0].mxu0
    %v704 = vadd.f32 0.0, %v703
    %v705 = vpop.f32.mrb[0].mxu0
    %v706 = vadd.f32 0.0, %v705
    %707 = vdwg.mxu0
    %708 = vmatprep.subr.mxu0 %v236
    %709 = vmatpush1.msra.mxu0 %v235
    %710 = vmatprep.subr.mxu0 %v240
    %711 = vmatpush1.msra.mxu0 %v239
    %712 = vmatprep.subr.mxu0 %v244
    %713 = vmatpush1.msra.mxu0 %v243
    %714 = vmatprep.subr.mxu0 %v248
    %715 = vmatpush1.msra.mxu0 %v247
    %716 = vmatprep.subr.mxu0 %v252
    %717 = vmatpush1.msra.mxu0 %v251
    %718 = vmatprep.subr.mxu0 %v256
    %719 = vmatpush1.msra.mxu0 %v255
    %720 = vmatprep.subr.mxu0 %v260
    %721 = vmatpush1.msra.mxu0 %v259
    %722 = vmatprep.subr.mxu0 %v264
    %723 = vmatpush1.msra.mxu0 %v263
    %724 = vmatprep.subr.mxu0 %v268
    %725 = vmatpush1.msra.mxu0 %v267
    %726 = vmatprep.subr.mxu0 %v272
    %727 = vmatpush1.msra.mxu0 %v271
    %728 = vmatprep.subr.mxu0 %v276
    %729 = vmatpush1.msra.mxu0 %v275
    %730 = vmatprep.subr.mxu0 %v280
    %731 = vmatpush1.msra.mxu0 %v279
    %732 = vmatprep.subr.mxu0 %v284
    %733 = vmatpush1.msra.mxu0 %v283
    %734 = vmatprep.subr.mxu0 %v288
    %735 = vmatpush1.msra.mxu0 %v287
    %736 = vmatprep.subr.mxu0 %v292
    %737 = vmatpush1.msra.mxu0 %v291
    %738 = vmatprep.subr.mxu0 %v296
    %739 = vmatpush1.msra.mxu0 %v295
    %740 = vmatprep.subr.mxu0 0.0
    %741 = vmatpush1.msra.mxu0 0.0
    %742 = vmatprep.subr.mxu0 0.0
    %743 = vmatpush1.msra.mxu0 0.0
    %744 = vmatprep.subr.mxu0 0.0
    %745 = vmatpush1.msra.mxu0 0.0
    %746 = vmatprep.subr.mxu0 0.0
    %747 = vmatpush1.msra.mxu0 0.0
    %748 = vmatprep.subr.mxu0 0.0
    %749 = vmatpush1.msra.mxu0 0.0
    %750 = vmatprep.subr.mxu0 0.0
    %751 = vmatpush1.msra.mxu0 0.0
    %752 = vmatprep.subr.mxu0 0.0
    %753 = vmatpush1.msra.mxu0 0.0
    %754 = vmatprep.subr.mxu0 0.0
    %755 = vmatpush1.msra.mxu0 0.0
    %756 = vmatprep.subr.mxu0 0.0
    %757 = vmatpush1.msra.mxu0 0.0
    %758 = vmatprep.subr.mxu0 0.0
    %759 = vmatpush1.msra.mxu0 0.0
    %760 = vmatprep.subr.mxu0 0.0
    %761 = vmatpush1.msra.mxu0 0.0
    %762 = vmatprep.subr.mxu0 0.0
    %763 = vmatpush1.msra.mxu0 0.0
    %764 = vmatprep.subr.mxu0 0.0
    %765 = vmatpush1.msra.mxu0 0.0
    %766 = vmatprep.subr.mxu0 0.0
    %767 = vmatpush1.msra.mxu0 0.0
    %768 = vmatprep.subr.mxu0 0.0
    %769 = vmatpush1.msra.mxu0 0.0
    %770 = vmatprep.subr.mxu0 0.0
    %771 = vmatpush1.msra.mxu0 0.0
    %772 = vmatprep.mubr.f32.mxu0 0.0
    %773 = vmatmul.mubr.f32.gmra.mrb[0].mxu0 %v636
    %v774 = vpop.f32.mrb[0].mxu0
    %v775 = vadd.f32 0.0, %v774
    %v776 = vpop.f32.mrb[0].mxu0
    %v777 = vadd.f32 0.0, %v776
    %778 = vdwg.mxu0
    %v779 = vadd.f32 %v158, %v704
    %v780 = vadd.f32 %v160, %v706
    %v781 = vadd.f32 %v229, %v775
    %v782 = vadd.f32 %v231, %v777
    %v783 = vxor.u32 %v779, 2147483648
    %v784 = vmul.f32 %v783, 1.442695
    %v785 = vpow.pop %v784
    %v786 = vadd.f32 %v785, 1.0
    %v787 = vrcp.pop %v786
    %v788 = vmul.f32 1.0, %v787
    %v789 = vxor.u32 %v780, 2147483648
    %v790 = vmul.f32 %v789, 1.442695
    %v791 = vpow.pop %v790
    %v792 = vadd.f32 %v791, 1.0
    %v793 = vrcp.pop %v792
    %v794 = vmul.f32 1.0, %v793
    %v795 = vtanh.pop %v781
    %v796 = vxor.u32 %v782, 2147483648
    %v797 = vmul.f32 %v796, 1.442695
    %v798 = vpow.pop %v797
    %v799 = vadd.f32 %v798, 1.0
    %v800 = vrcp.pop %v799
    %v801 = vmul.f32 1.0, %v800
    %v802 = vmul.f32 %v794, %v634
    %v803 = vmul.f32 %v788, %v795
    %v804 = vadd.f32 %v802, %v803
    %v805 = vtanh.pop %v804
    %v806 = vmul.f32 %v801, %v805
    %807 = vmatprep.subr.mxu0 %v234
    %808 = vmatpush1.msra.mxu0 %v233
    %809 = vmatprep.subr.mxu0 %v238
    %810 = vmatpush1.msra.mxu0 %v237
    %811 = vmatprep.subr.mxu0 %v242
    %812 = vmatpush1.msra.mxu0 %v241
    %813 = vmatprep.subr.mxu0 %v246
    %814 = vmatpush1.msra.mxu0 %v245
    %815 = vmatprep.subr.mxu0 %v250
    %816 = vmatpush1.msra.mxu0 %v249
    %817 = vmatprep.subr.mxu0 %v254
    %818 = vmatpush1.msra.mxu0 %v253
    %819 = vmatprep.subr.mxu0 %v258
    %820 = vmatpush1.msra.mxu0 %v257
    %821 = vmatprep.subr.mxu0 %v262
    %822 = vmatpush1.msra.mxu0 %v261
    %823 = vmatprep.subr.mxu0 %v266
    %824 = vmatpush1.msra.mxu0 %v265
    %825 = vmatprep.subr.mxu0 %v270
    %826 = vmatpush1.msra.mxu0 %v269
    %827 = vmatprep.subr.mxu0 %v274
    %828 = vmatpush1.msra.mxu0 %v273
    %829 = vmatprep.subr.mxu0 %v278
    %830 = vmatpush1.msra.mxu0 %v277
    %831 = vmatprep.subr.mxu0 %v282
    %832 = vmatpush1.msra.mxu0 %v281
    %833 = vmatprep.subr.mxu0 %v286
    %834 = vmatpush1.msra.mxu0 %v285
    %835 = vmatprep.subr.mxu0 %v290
    %836 = vmatpush1.msra.mxu0 %v289
    %837 = vmatprep.subr.mxu0 %v294
    %838 = vmatpush1.msra.mxu0 %v293
    %839 = vmatprep.subr.mxu0 0.0
    %840 = vmatpush1.msra.mxu0 0.0
    %841 = vmatprep.subr.mxu0 0.0
    %842 = vmatpush1.msra.mxu0 0.0
    %843 = vmatprep.subr.mxu0 0.0
    %844 = vmatpush1.msra.mxu0 0.0
    %845 = vmatprep.subr.mxu0 0.0
    %846 = vmatpush1.msra.mxu0 0.0
    %847 = vmatprep.subr.mxu0 0.0
    %848 = vmatpush1.msra.mxu0 0.0
    %849 = vmatprep.subr.mxu0 0.0
    %850 = vmatpush1.msra.mxu0 0.0
    %851 = vmatprep.subr.mxu0 0.0
    %852 = vmatpush1.msra.mxu0 0.0
    %853 = vmatprep.subr.mxu0 0.0
    %854 = vmatpush1.msra.mxu0 0.0
    %855 = vmatprep.subr.mxu0 0.0
    %856 = vmatpush1.msra.mxu0 0.0
    %857 = vmatprep.subr.mxu0 0.0
    %858 = vmatpush1.msra.mxu0 0.0
    %859 = vmatprep.subr.mxu0 0.0
    %860 = vmatpush1.msra.mxu0 0.0
    %861 = vmatprep.subr.mxu0 0.0
    %862 = vmatpush1.msra.mxu0 0.0
    %863 = vmatprep.subr.mxu0 0.0
    %864 = vmatpush1.msra.mxu0 0.0
    %865 = vmatprep.subr.mxu0 0.0
    %866 = vmatpush1.msra.mxu0 0.0
    %867 = vmatprep.subr.mxu0 0.0
    %868 = vmatpush1.msra.mxu0 0.0
    %869 = vmatprep.subr.mxu0 0.0
    %870 = vmatpush1.msra.mxu0 0.0
    %871 = vmatprep.mubr.f32.mxu0 0.0
    %872 = vmatmul.mubr.f32.gmra.mrb[0].mxu0 %v806
    %v873 = vpop.f32.mrb[0].mxu0
    %v874 = vadd.f32 0.0, %v873
    %v875 = vpop.f32.mrb[0].mxu0
    %v876 = vadd.f32 0.0, %v875
    %877 = vdwg.mxu0
    %878 = vmatprep.subr.mxu0 %v236
    %879 = vmatpush1.msra.mxu0 %v235
    %880 = vmatprep.subr.mxu0 %v240
    %881 = vmatpush1.msra.mxu0 %v239
    %882 = vmatprep.subr.mxu0 %v244
    %883 = vmatpush1.msra.mxu0 %v243
    %884 = vmatprep.subr.mxu0 %v248
    %885 = vmatpush1.msra.mxu0 %v247
    %886 = vmatprep.subr.mxu0 %v252
    %887 = vmatpush1.msra.mxu0 %v251
    %888 = vmatprep.subr.mxu0 %v256
    %889 = vmatpush1.msra.mxu0 %v255
    %890 = vmatprep.subr.mxu0 %v260
    %891 = vmatpush1.msra.mxu0 %v259
    %892 = vmatprep.subr.mxu0 %v264
    %893 = vmatpush1.msra.mxu0 %v263
    %894 = vmatprep.subr.mxu0 %v268
    %895 = vmatpush1.msra.mxu0 %v267
    %896 = vmatprep.subr.mxu0 %v272
    %897 = vmatpush1.msra.mxu0 %v271
    %898 = vmatprep.subr.mxu0 %v276
    %899 = vmatpush1.msra.mxu0 %v275
    %900 = vmatprep.subr.mxu0 %v280
    %901 = vmatpush1.msra.mxu0 %v279
    %902 = vmatprep.subr.mxu0 %v284
    %903 = vmatpush1.msra.mxu0 %v283
    %904 = vmatprep.subr.mxu0 %v288
    %905 = vmatpush1.msra.mxu0 %v287
    %906 = vmatprep.subr.mxu0 %v292
    %907 = vmatpush1.msra.mxu0 %v291
    %908 = vmatprep.subr.mxu0 %v296
    %909 = vmatpush1.msra.mxu0 %v295
    %910 = vmatprep.subr.mxu0 0.0
    %911 = vmatpush1.msra.mxu0 0.0
    %912 = vmatprep.subr.mxu0 0.0
    %913 = vmatpush1.msra.mxu0 0.0
    %914 = vmatprep.subr.mxu0 0.0
    %915 = vmatpush1.msra.mxu0 0.0
    %916 = vmatprep.subr.mxu0 0.0
    %917 = vmatpush1.msra.mxu0 0.0
    %918 = vmatprep.subr.mxu0 0.0
    %919 = vmatpush1.msra.mxu0 0.0
    %920 = vmatprep.subr.mxu0 0.0
    %921 = vmatpush1.msra.mxu0 0.0
    %922 = vmatprep.subr.mxu0 0.0
    %923 = vmatpush1.msra.mxu0 0.0
    %924 = vmatprep.subr.mxu0 0.0
    %925 = vmatpush1.msra.mxu0 0.0
    %926 = vmatprep.subr.mxu0 0.0
    %927 = vmatpush1.msra.mxu0 0.0
    %928 = vmatprep.subr.mxu0 0.0
    %929 = vmatpush1.msra.mxu0 0.0
    %930 = vmatprep.subr.mxu0 0.0
    %931 = vmatpush1.msra.mxu0 0.0
    %932 = vmatprep.subr.mxu0 0.0
    %933 = vmatpush1.msra.mxu0 0.0
    %934 = vmatprep.subr.mxu0 0.0
    %935 = vmatpush1.msra.mxu0 0.0
    %936 = vmatprep.subr.mxu0 0.0
    %937 = vmatpush1.msra.mxu0 0.0
    %938 = vmatprep.subr.mxu0 0.0
    %939 = vmatpush1.msra.mxu0 0.0
    %940 = vmatprep.subr.mxu0 0.0
    %941 = vmatpush1.msra.mxu0 0.0
    %942 = vmatprep.mubr.f32.mxu0 0.0
    %943 = vmatmul.mubr.f32.gmra.mrb[0].mxu0 %v806
    %v944 = vpop.f32.mrb[0].mxu0
    %v945 = vadd.f32 0.0, %v944
    %v946 = vpop.f32.mrb[0].mxu0
    %v947 = vadd.f32 0.0, %v946
    %948 = vdwg.mxu0
    %v949 = vadd.f32 %v158, %v874
    %v950 = vadd.f32 %v160, %v876
    %v951 = vadd.f32 %v229, %v945
    %v952 = vadd.f32 %v231, %v947
    %v953 = vxor.u32 %v949, 2147483648
    %v954 = vmul.f32 %v953, 1.442695
    %v955 = vpow.pop %v954
    %v956 = vadd.f32 %v955, 1.0
    %v957 = vrcp.pop %v956
    %v958 = vmul.f32 1.0, %v957
    %v959 = vxor.u32 %v950, 2147483648
    %v960 = vmul.f32 %v959, 1.442695
    %v961 = vpow.pop %v960
    %v962 = vadd.f32 %v961, 1.0
    %v963 = vrcp.pop %v962
    %v964 = vmul.f32 1.0, %v963
    %v965 = vtanh.pop %v951
    %v966 = vxor.u32 %v952, 2147483648
    %v967 = vmul.f32 %v966, 1.442695
    %v968 = vpow.pop %v967
    %v969 = vadd.f32 %v968, 1.0
    %v970 = vrcp.pop %v969
    %v971 = vmul.f32 1.0, %v970
    %v972 = vmul.f32 %v964, %v804
    %v973 = vmul.f32 %v958, %v965
    %v974 = vadd.f32 %v972, %v973
    %v975 = vtanh.pop %v974
    %v976 = vmul.f32 %v971, %v975
    %977 = vmatprep.subr.mxu0 %v234
    %978 = vmatpush1.msra.mxu0 %v233
    %979 = vmatprep.subr.mxu0 %v238
    %980 = vmatpush1.msra.mxu0 %v237
    %981 = vmatprep.subr.mxu0 %v242
    %982 = vmatpush1.msra.mxu0 %v241
    %983 = vmatprep.subr.mxu0 %v246
    %984 = vmatpush1.msra.mxu0 %v245
    %985 = vmatprep.subr.mxu0 %v250
    %986 = vmatpush1.msra.mxu0 %v249
    %987 = vmatprep.subr.mxu0 %v254
    %988 = vmatpush1.msra.mxu0 %v253
    %989 = vmatprep.subr.mxu0 %v258
    %990 = vmatpush1.msra.mxu0 %v257
    %991 = vmatprep.subr.mxu0 %v262
    %992 = vmatpush1.msra.mxu0 %v261
    %993 = vmatprep.subr.mxu0 %v266
    %994 = vmatpush1.msra.mxu0 %v265
    %995 = vmatprep.subr.mxu0 %v270
    %996 = vmatpush1.msra.mxu0 %v269
    %997 = vmatprep.subr.mxu0 %v274
    %998 = vmatpush1.msra.mxu0 %v273
    %999 = vmatprep.subr.mxu0 %v278
    %1000 = vmatpush1.msra.mxu0 %v277
    %1001 = vmatprep.subr.mxu0 %v282
    %1002 = vmatpush1.msra.mxu0 %v281
    %1003 = vmatprep.subr.mxu0 %v286
    %1004 = vmatpush1.msra.mxu0 %v285
    %1005 = vmatprep.subr.mxu0 %v290
    %1006 = vmatpush1.msra.mxu0 %v289
    %1007 = vmatprep.subr.mxu0 %v294
    %1008 = vmatpush1.msra.mxu0 %v293
    %1009 = vmatprep.subr.mxu0 0.0
    %1010 = vmatpush1.msra.mxu0 0.0
    %1011 = vmatprep.subr.mxu0 0.0
    %1012 = vmatpush1.msra.mxu0 0.0
    %1013 = vmatprep.subr.mxu0 0.0
    %1014 = vmatpush1.msra.mxu0 0.0
    %1015 = vmatprep.subr.mxu0 0.0
    %1016 = vmatpush1.msra.mxu0 0.0
    %1017 = vmatprep.subr.mxu0 0.0
    %1018 = vmatpush1.msra.mxu0 0.0
    %1019 = vmatprep.subr.mxu0 0.0
    %1020 = vmatpush1.msra.mxu0 0.0
    %1021 = vmatprep.subr.mxu0 0.0
    %1022 = vmatpush1.msra.mxu0 0.0
    %1023 = vmatprep.subr.mxu0 0.0
    %1024 = vmatpush1.msra.mxu0 0.0
    %1025 = vmatprep.subr.mxu0 0.0
    %1026 = vmatpush1.msra.mxu0 0.0
    %1027 = vmatprep.subr.mxu0 0.0
    %1028 = vmatpush1.msra.mxu0 0.0
    %1029 = vmatprep.subr.mxu0 0.0
    %1030 = vmatpush1.msra.mxu0 0.0
    %1031 = vmatprep.subr.mxu0 0.0
    %1032 = vmatpush1.msra.mxu0 0.0
    %1033 = vmatprep.subr.mxu0 0.0
    %1034 = vmatpush1.msra.mxu0 0.0
    %1035 = vmatprep.subr.mxu0 0.0
    %1036 = vmatpush1.msra.mxu0 0.0
    %1037 = vmatprep.subr.mxu0 0.0
    %1038 = vmatpush1.msra.mxu0 0.0
    %1039 = vmatprep.subr.mxu0 0.0
    %1040 = vmatpush1.msra.mxu0 0.0
    %1041 = vmatprep.mubr.f32.mxu0 0.0
    %1042 = vmatmul.mubr.f32.gmra.mrb[0].mxu0 %v976
    %v1043 = vpop.f32.mrb[0].mxu0
    %v1044 = vadd.f32 0.0, %v1043
    %v1045 = vpop.f32.mrb[0].mxu0
    %v1046 = vadd.f32 0.0, %v1045
    %1047 = vdwg.mxu0
    %1048 = vmatprep.subr.mxu0 %v236
    %1049 = vmatpush1.msra.mxu0 %v235
    %1050 = vmatprep.subr.mxu0 %v240
    %1051 = vmatpush1.msra.mxu0 %v239
    %1052 = vmatprep.subr.mxu0 %v244
    %1053 = vmatpush1.msra.mxu0 %v243
    %1054 = vmatprep.subr.mxu0 %v248
    %1055 = vmatpush1.msra.mxu0 %v247
    %1056 = vmatprep.subr.mxu0 %v252
    %1057 = vmatpush1.msra.mxu0 %v251
    %1058 = vmatprep.subr.mxu0 %v256
    %1059 = vmatpush1.msra.mxu0 %v255
    %1060 = vmatprep.subr.mxu0 %v260
    %1061 = vmatpush1.msra.mxu0 %v259
    %1062 = vmatprep.subr.mxu0 %v264
    %1063 = vmatpush1.msra.mxu0 %v263
    %1064 = vmatprep.subr.mxu0 %v268
    %1065 = vmatpush1.msra.mxu0 %v267
    %1066 = vmatprep.subr.mxu0 %v272
    %1067 = vmatpush1.msra.mxu0 %v271
    %1068 = vmatprep.subr.mxu0 %v276
    %1069 = vmatpush1.msra.mxu0 %v275
    %1070 = vmatprep.subr.mxu0 %v280
    %1071 = vmatpush1.msra.mxu0 %v279
    %1072 = vmatprep.subr.mxu0 %v284
    %1073 = vmatpush1.msra.mxu0 %v283
    %1074 = vmatprep.subr.mxu0 %v288
    %1075 = vmatpush1.msra.mxu0 %v287
    %1076 = vmatprep.subr.mxu0 %v292
    %1077 = vmatpush1.msra.mxu0 %v291
    %1078 = vmatprep.subr.mxu0 %v296
    %1079 = vmatpush1.msra.mxu0 %v295
    %1080 = vmatprep.subr.mxu0 0.0
    %1081 = vmatpush1.msra.mxu0 0.0
    %1082 = vmatprep.subr.mxu0 0.0
    %1083 = vmatpush1.msra.mxu0 0.0
    %1084 = vmatprep.subr.mxu0 0.0
    %1085 = vmatpush1.msra.mxu0 0.0
    %1086 = vmatprep.subr.mxu0 0.0
    %1087 = vmatpush1.msra.mxu0 0.0
    %1088 = vmatprep.subr.mxu0 0.0
    %1089 = vmatpush1.msra.mxu0 0.0
    %1090 = vmatprep.subr.mxu0 0.0
    %1091 = vmatpush1.msra.mxu0 0.0
    %1092 = vmatprep.subr.mxu0 0.0
    %1093 = vmatpush1.msra.mxu0 0.0
    %1094 = vmatprep.subr.mxu0 0.0
    %1095 = vmatpush1.msra.mxu0 0.0
    %1096 = vmatprep.subr.mxu0 0.0
    %1097 = vmatpush1.msra.mxu0 0.0
    %1098 = vmatprep.subr.mxu0 0.0
    %1099 = vmatpush1.msra.mxu0 0.0
    %1100 = vmatprep.subr.mxu0 0.0
    %1101 = vmatpush1.msra.mxu0 0.0
    %1102 = vmatprep.subr.mxu0 0.0
    %1103 = vmatpush1.msra.mxu0 0.0
    %1104 = vmatprep.subr.mxu0 0.0
    %1105 = vmatpush1.msra.mxu0 0.0
    %1106 = vmatprep.subr.mxu0 0.0
    %1107 = vmatpush1.msra.mxu0 0.0
    %1108 = vmatprep.subr.mxu0 0.0
    %1109 = vmatpush1.msra.mxu0 0.0
    %1110 = vmatprep.subr.mxu0 0.0
    %1111 = vmatpush1.msra.mxu0 0.0
    %1112 = vmatprep.mubr.f32.mxu0 0.0
    %1113 = vmatmul.mubr.f32.gmra.mrb[0].mxu0 %v976
    %v1114 = vpop.f32.mrb[0].mxu0
    %v1115 = vadd.f32 0.0, %v1114
    %v1116 = vpop.f32.mrb[0].mxu0
    %v1117 = vadd.f32 0.0, %v1116
    %1118 = vdwg.mxu0
    %v1119 = vadd.f32 %v158, %v1044
    %v1120 = vadd.f32 %v160, %v1046
    %v1121 = vadd.f32 %v229, %v1115
    %v1122 = vadd.f32 %v231, %v1117
    %v1123 = vxor.u32 %v1119, 2147483648
    %v1124 = vmul.f32 %v1123, 1.442695
    %v1125 = vpow.pop %v1124
    %v1126 = vadd.f32 %v1125, 1.0
    %v1127 = vrcp.pop %v1126
    %v1128 = vmul.f32 1.0, %v1127
    %v1129 = vxor.u32 %v1120, 2147483648
    %v1130 = vmul.f32 %v1129, 1.442695
    %v1131 = vpow.pop %v1130
    %v1132 = vadd.f32 %v1131, 1.0
    %v1133 = vrcp.pop %v1132
    %v1134 = vmul.f32 1.0, %v1133
    %v1135 = vtanh.pop %v1121
    %v1136 = vxor.u32 %v1122, 2147483648
    %v1137 = vmul.f32 %v1136, 1.442695
    %v1138 = vpow.pop %v1137
    %v1139 = vadd.f32 %v1138, 1.0
    %v1140 = vrcp.pop %v1139
    %v1141 = vmul.f32 1.0, %v1140
    %v1142 = vmul.f32 %v1134, %v974
    %v1143 = vmul.f32 %v1128, %v1135
    %v1144 = vadd.f32 %v1142, %v1143
    %v1145 = vtanh.pop %v1144
    %v1146 = vmul.f32 %v1141, %v1145
    %1147 = vmatprep.subr.mxu0 %v234
    %1148 = vmatpush1.msra.mxu0 %v233
    %1149 = vmatprep.subr.mxu0 %v238
    %1150 = vmatpush1.msra.mxu0 %v237
    %1151 = vmatprep.subr.mxu0 %v242
    %1152 = vmatpush1.msra.mxu0 %v241
    %1153 = vmatprep.subr.mxu0 %v246
    %1154 = vmatpush1.msra.mxu0 %v245
    %1155 = vmatprep.subr.mxu0 %v250
    %1156 = vmatpush1.msra.mxu0 %v249
    %1157 = vmatprep.subr.mxu0 %v254
    %1158 = vmatpush1.msra.mxu0 %v253
    %1159 = vmatprep.subr.mxu0 %v258
    %1160 = vmatpush1.msra.mxu0 %v257
    %1161 = vmatprep.subr.mxu0 %v262
    %1162 = vmatpush1.msra.mxu0 %v261
    %1163 = vmatprep.subr.mxu0 %v266
    %1164 = vmatpush1.msra.mxu0 %v265
    %1165 = vmatprep.subr.mxu0 %v270
    %1166 = vmatpush1.msra.mxu0 %v269
    %1167 = vmatprep.subr.mxu0 %v274
    %1168 = vmatpush1.msra.mxu0 %v273
    %1169 = vmatprep.subr.mxu0 %v278
    %1170 = vmatpush1.msra.mxu0 %v277
    %1171 = vmatprep.subr.mxu0 %v282
    %1172 = vmatpush1.msra.mxu0 %v281
    %1173 = vmatprep.subr.mxu0 %v286
    %1174 = vmatpush1.msra.mxu0 %v285
    %1175 = vmatprep.subr.mxu0 %v290
    %1176 = vmatpush1.msra.mxu0 %v289
    %1177 = vmatprep.subr.mxu0 %v294
    %1178 = vmatpush1.msra.mxu0 %v293
    %1179 = vmatprep.subr.mxu0 0.0
    %1180 = vmatpush1.msra.mxu0 0.0
    %1181 = vmatprep.subr.mxu0 0.0
    %1182 = vmatpush1.msra.mxu0 0.0
    %1183 = vmatprep.subr.mxu0 0.0
    %1184 = vmatpush1.msra.mxu0 0.0
    %1185 = vmatprep.subr.mxu0 0.0
    %1186 = vmatpush1.msra.mxu0 0.0
    %1187 = vmatprep.subr.mxu0 0.0
    %1188 = vmatpush1.msra.mxu0 0.0
    %1189 = vmatprep.subr.mxu0 0.0
    %1190 = vmatpush1.msra.mxu0 0.0
    %1191 = vmatprep.subr.mxu0 0.0
    %1192 = vmatpush1.msra.mxu0 0.0
    %1193 = vmatprep.subr.mxu0 0.0
    %1194 = vmatpush1.msra.mxu0 0.0
    %1195 = vmatprep.subr.mxu0 0.0
    %1196 = vmatpush1.msra.mxu0 0.0
    %1197 = vmatprep.subr.mxu0 0.0
    %1198 = vmatpush1.msra.mxu0 0.0
    %1199 = vmatprep.subr.mxu0 0.0
    %1200 = vmatpush1.msra.mxu0 0.0
    %1201 = vmatprep.subr.mxu0 0.0
    %1202 = vmatpush1.msra.mxu0 0.0
    %1203 = vmatprep.subr.mxu0 0.0
    %1204 = vmatpush1.msra.mxu0 0.0
    %1205 = vmatprep.subr.mxu0 0.0
    %1206 = vmatpush1.msra.mxu0 0.0
    %1207 = vmatprep.subr.mxu0 0.0
    %1208 = vmatpush1.msra.mxu0 0.0
    %1209 = vmatprep.subr.mxu0 0.0
    %1210 = vmatpush1.msra.mxu0 0.0
    %1211 = vmatprep.mubr.f32.mxu0 0.0
    %1212 = vmatmul.mubr.f32.gmra.mrb[0].mxu0 %v1146
    %v1213 = vpop.f32.mrb[0].mxu0
    %v1214 = vadd.f32 0.0, %v1213
    %v1215 = vpop.f32.mrb[0].mxu0
    %v1216 = vadd.f32 0.0, %v1215
    %1217 = vdwg.mxu0
    %1218 = vmatprep.subr.mxu0 %v236
    %1219 = vmatpush1.msra.mxu0 %v235
    %1220 = vmatprep.subr.mxu0 %v240
    %1221 = vmatpush1.msra.mxu0 %v239
    %1222 = vmatprep.subr.mxu0 %v244
    %1223 = vmatpush1.msra.mxu0 %v243
    %1224 = vmatprep.subr.mxu0 %v248
    %1225 = vmatpush1.msra.mxu0 %v247
    %1226 = vmatprep.subr.mxu0 %v252
    %1227 = vmatpush1.msra.mxu0 %v251
    %1228 = vmatprep.subr.mxu0 %v256
    %1229 = vmatpush1.msra.mxu0 %v255
    %1230 = vmatprep.subr.mxu0 %v260
    %1231 = vmatpush1.msra.mxu0 %v259
    %1232 = vmatprep.subr.mxu0 %v264
    %1233 = vmatpush1.msra.mxu0 %v263
    %1234 = vmatprep.subr.mxu0 %v268
    %1235 = vmatpush1.msra.mxu0 %v267
    %1236 = vmatprep.subr.mxu0 %v272
    %1237 = vmatpush1.msra.mxu0 %v271
    %1238 = vmatprep.subr.mxu0 %v276
    %1239 = vmatpush1.msra.mxu0 %v275
    %1240 = vmatprep.subr.mxu0 %v280
    %1241 = vmatpush1.msra.mxu0 %v279
    %1242 = vmatprep.subr.mxu0 %v284
    %1243 = vmatpush1.msra.mxu0 %v283
    %1244 = vmatprep.subr.mxu0 %v288
    %1245 = vmatpush1.msra.mxu0 %v287
    %1246 = vmatprep.subr.mxu0 %v292
    %1247 = vmatpush1.msra.mxu0 %v291
    %1248 = vmatprep.subr.mxu0 %v296
    %1249 = vmatpush1.msra.mxu0 %v295
    %1250 = vmatprep.subr.mxu0 0.0
    %1251 = vmatpush1.msra.mxu0 0.0
    %1252 = vmatprep.subr.mxu0 0.0
    %1253 = vmatpush1.msra.mxu0 0.0
    %1254 = vmatprep.subr.mxu0 0.0
    %1255 = vmatpush1.msra.mxu0 0.0
    %1256 = vmatprep.subr.mxu0 0.0
    %1257 = vmatpush1.msra.mxu0 0.0
    %1258 = vmatprep.subr.mxu0 0.0
    %1259 = vmatpush1.msra.mxu0 0.0
    %1260 = vmatprep.subr.mxu0 0.0
    %1261 = vmatpush1.msra.mxu0 0.0
    %1262 = vmatprep.subr.mxu0 0.0
    %1263 = vmatpush1.msra.mxu0 0.0
    %1264 = vmatprep.subr.mxu0 0.0
    %1265 = vmatpush1.msra.mxu0 0.0
    %1266 = vmatprep.subr.mxu0 0.0
    %1267 = vmatpush1.msra.mxu0 0.0
    %1268 = vmatprep.subr.mxu0 0.0
    %1269 = vmatpush1.msra.mxu0 0.0
    %1270 = vmatprep.subr.mxu0 0.0
    %1271 = vmatpush1.msra.mxu0 0.0
    %1272 = vmatprep.subr.mxu0 0.0
    %1273 = vmatpush1.msra.mxu0 0.0
    %1274 = vmatprep.subr.mxu0 0.0
    %1275 = vmatpush1.msra.mxu0 0.0
    %1276 = vmatprep.subr.mxu0 0.0
    %1277 = vmatpush1.msra.mxu0 0.0
    %1278 = vmatprep.subr.mxu0 0.0
    %1279 = vmatpush1.msra.mxu0 0.0
    %1280 = vmatprep.subr.mxu0 0.0
    %1281 = vmatpush1.msra.mxu0 0.0
    %1282 = vmatprep.mubr.f32.mxu0 0.0
    %1283 = vmatmul.mubr.f32.gmra.mrb[0].mxu0 %v1146
    %v1284 = vpop.f32.mrb[0].mxu0
    %v1285 = vadd.f32 0.0, %v1284
    %v1286 = vpop.f32.mrb[0].mxu0
    %v1287 = vadd.f32 0.0, %v1286
    %1288 = vdwg.mxu0
    %v1289 = vadd.f32 %v158, %v1214
    %v1290 = vadd.f32 %v160, %v1216
    %v1291 = vadd.f32 %v229, %v1285
    %v1292 = vadd.f32 %v231, %v1287
    %v1293 = vxor.u32 %v1289, 2147483648
    %v1294 = vmul.f32 %v1293, 1.442695
    %v1295 = vpow.pop %v1294
    %v1296 = vadd.f32 %v1295, 1.0
    %v1297 = vrcp.pop %v1296
    %v1298 = vmul.f32 1.0, %v1297
    %v1299 = vxor.u32 %v1290, 2147483648
    %v1300 = vmul.f32 %v1299, 1.442695
    %v1301 = vpow.pop %v1300
    %v1302 = vadd.f32 %v1301, 1.0
    %v1303 = vrcp.pop %v1302
    %v1304 = vmul.f32 1.0, %v1303
    %v1305 = vtanh.pop %v1291
    %v1306 = vxor.u32 %v1292, 2147483648
    %v1307 = vmul.f32 %v1306, 1.442695
    %v1308 = vpow.pop %v1307
    %v1309 = vadd.f32 %v1308, 1.0
    %v1310 = vrcp.pop %v1309
    %v1311 = vmul.f32 1.0, %v1310
    %v1312 = vmul.f32 %v1304, %v1144
    %v1313 = vmul.f32 %v1298, %v1305
    %v1314 = vadd.f32 %v1312, %v1313
    %v1315 = vtanh.pop %v1314
    %v1316 = vmul.f32 %v1311, %v1315
    %1317 = vmatprep.subr.mxu0 %v234
    %1318 = vmatpush1.msra.mxu0 %v233
    %1319 = vmatprep.subr.mxu0 %v238
    %1320 = vmatpush1.msra.mxu0 %v237
    %1321 = vmatprep.subr.mxu0 %v242
    %1322 = vmatpush1.msra.mxu0 %v241
    %1323 = vmatprep.subr.mxu0 %v246
    %1324 = vmatpush1.msra.mxu0 %v245
    %1325 = vmatprep.subr.mxu0 %v250
    %1326 = vmatpush1.msra.mxu0 %v249
    %1327 = vmatprep.subr.mxu0 %v254
    %1328 = vmatpush1.msra.mxu0 %v253
    %1329 = vmatprep.subr.mxu0 %v258
    %1330 = vmatpush1.msra.mxu0 %v257
    %1331 = vmatprep.subr.mxu0 %v262
    %1332 = vmatpush1.msra.mxu0 %v261
    %1333 = vmatprep.subr.mxu0 %v266
    %1334 = vmatpush1.msra.mxu0 %v265
    %1335 = vmatprep.subr.mxu0 %v270
    %1336 = vmatpush1.msra.mxu0 %v269
    %1337 = vmatprep.subr.mxu0 %v274
    %1338 = vmatpush1.msra.mxu0 %v273
    %1339 = vmatprep.subr.mxu0 %v278
    %1340 = vmatpush1.msra.mxu0 %v277
    %1341 = vmatprep.subr.mxu0 %v282
    %1342 = vmatpush1.msra.mxu0 %v281
    %1343 = vmatprep.subr.mxu0 %v286
    %1344 = vmatpush1.msra.mxu0 %v285
    %1345 = vmatprep.subr.mxu0 %v290
    %1346 = vmatpush1.msra.mxu0 %v289
    %1347 = vmatprep.subr.mxu0 %v294
    %1348 = vmatpush1.msra.mxu0 %v293
    %1349 = vmatprep.subr.mxu0 0.0
    %1350 = vmatpush1.msra.mxu0 0.0
    %1351 = vmatprep.subr.mxu0 0.0
    %1352 = vmatpush1.msra.mxu0 0.0
    %1353 = vmatprep.subr.mxu0 0.0
    %1354 = vmatpush1.msra.mxu0 0.0
    %1355 = vmatprep.subr.mxu0 0.0
    %1356 = vmatpush1.msra.mxu0 0.0
    %1357 = vmatprep.subr.mxu0 0.0
    %1358 = vmatpush1.msra.mxu0 0.0
    %1359 = vmatprep.subr.mxu0 0.0
    %1360 = vmatpush1.msra.mxu0 0.0
    %1361 = vmatprep.subr.mxu0 0.0
    %1362 = vmatpush1.msra.mxu0 0.0
    %1363 = vmatprep.subr.mxu0 0.0
    %1364 = vmatpush1.msra.mxu0 0.0
    %1365 = vmatprep.subr.mxu0 0.0
    %1366 = vmatpush1.msra.mxu0 0.0
    %1367 = vmatprep.subr.mxu0 0.0
    %1368 = vmatpush1.msra.mxu0 0.0
    %1369 = vmatprep.subr.mxu0 0.0
    %1370 = vmatpush1.msra.mxu0 0.0
    %1371 = vmatprep.subr.mxu0 0.0
    %1372 = vmatpush1.msra.mxu0 0.0
    %1373 = vmatprep.subr.mxu0 0.0
    %1374 = vmatpush1.msra.mxu0 0.0
    %1375 = vmatprep.subr.mxu0 0.0
    %1376 = vmatpush1.msra.mxu0 0.0
    %1377 = vmatprep.subr.mxu0 0.0
    %1378 = vmatpush1.msra.mxu0 0.0
    %1379 = vmatprep.subr.mxu0 0.0
    %1380 = vmatpush1.msra.mxu0 0.0
    %1381 = vmatprep.mubr.f32.mxu0 0.0
    %1382 = vmatmul.mubr.f32.gmra.mrb[0].mxu0 %v1316
    %v1383 = vpop.f32.mrb[0].mxu0
    %v1384 = vadd.f32 0.0, %v1383
    %v1385 = vpop.f32.mrb[0].mxu0
    %v1386 = vadd.f32 0.0, %v1385
    %1387 = vdwg.mxu0
    %1388 = vmatprep.subr.mxu0 %v236
    %1389 = vmatpush1.msra.mxu0 %v235
    %1390 = vmatprep.subr.mxu0 %v240
    %1391 = vmatpush1.msra.mxu0 %v239
    %1392 = vmatprep.subr.mxu0 %v244
    %1393 = vmatpush1.msra.mxu0 %v243
    %1394 = vmatprep.subr.mxu0 %v248
    %1395 = vmatpush1.msra.mxu0 %v247
    %1396 = vmatprep.subr.mxu0 %v252
    %1397 = vmatpush1.msra.mxu0 %v251
    %1398 = vmatprep.subr.mxu0 %v256
    %1399 = vmatpush1.msra.mxu0 %v255
    %1400 = vmatprep.subr.mxu0 %v260
    %1401 = vmatpush1.msra.mxu0 %v259
    %1402 = vmatprep.subr.mxu0 %v264
    %1403 = vmatpush1.msra.mxu0 %v263
    %1404 = vmatprep.subr.mxu0 %v268
    %1405 = vmatpush1.msra.mxu0 %v267
    %1406 = vmatprep.subr.mxu0 %v272
    %1407 = vmatpush1.msra.mxu0 %v271
    %1408 = vmatprep.subr.mxu0 %v276
    %1409 = vmatpush1.msra.mxu0 %v275
    %1410 = vmatprep.subr.mxu0 %v280
    %1411 = vmatpush1.msra.mxu0 %v279
    %1412 = vmatprep.subr.mxu0 %v284
    %1413 = vmatpush1.msra.mxu0 %v283
    %1414 = vmatprep.subr.mxu0 %v288
    %1415 = vmatpush1.msra.mxu0 %v287
    %1416 = vmatprep.subr.mxu0 %v292
    %1417 = vmatpush1.msra.mxu0 %v291
    %1418 = vmatprep.subr.mxu0 %v296
    %1419 = vmatpush1.msra.mxu0 %v295
    %1420 = vmatprep.subr.mxu0 0.0
    %1421 = vmatpush1.msra.mxu0 0.0
    %1422 = vmatprep.subr.mxu0 0.0
    %1423 = vmatpush1.msra.mxu0 0.0
    %1424 = vmatprep.subr.mxu0 0.0
    %1425 = vmatpush1.msra.mxu0 0.0
    %1426 = vmatprep.subr.mxu0 0.0
    %1427 = vmatpush1.msra.mxu0 0.0
    %1428 = vmatprep.subr.mxu0 0.0
    %1429 = vmatpush1.msra.mxu0 0.0
    %1430 = vmatprep.subr.mxu0 0.0
    %1431 = vmatpush1.msra.mxu0 0.0
    %1432 = vmatprep.subr.mxu0 0.0
    %1433 = vmatpush1.msra.mxu0 0.0
    %1434 = vmatprep.subr.mxu0 0.0
    %1435 = vmatpush1.msra.mxu0 0.0
    %1436 = vmatprep.subr.mxu0 0.0
    %1437 = vmatpush1.msra.mxu0 0.0
    %1438 = vmatprep.subr.mxu0 0.0
    %1439 = vmatpush1.msra.mxu0 0.0
    %1440 = vmatprep.subr.mxu0 0.0
    %1441 = vmatpush1.msra.mxu0 0.0
    %1442 = vmatprep.subr.mxu0 0.0
    %1443 = vmatpush1.msra.mxu0 0.0
    %1444 = vmatprep.subr.mxu0 0.0
    %1445 = vmatpush1.msra.mxu0 0.0
    %1446 = vmatprep.subr.mxu0 0.0
    %1447 = vmatpush1.msra.mxu0 0.0
    %1448 = vmatprep.subr.mxu0 0.0
    %1449 = vmatpush1.msra.mxu0 0.0
    %1450 = vmatprep.subr.mxu0 0.0
    %1451 = vmatpush1.msra.mxu0 0.0
    %1452 = vmatprep.mubr.f32.mxu0 0.0
    %1453 = vmatmul.mubr.f32.gmra.mrb[0].mxu0 %v1316
    %v1454 = vpop.f32.mrb[0].mxu0
    %v1455 = vadd.f32 0.0, %v1454
    %v1456 = vpop.f32.mrb[0].mxu0
    %v1457 = vadd.f32 0.0, %v1456
    %1458 = vdwg.mxu0
    %v1459 = vadd.f32 %v158, %v1384
    %v1460 = vadd.f32 %v160, %v1386
    %v1461 = vadd.f32 %v229, %v1455
    %v1462 = vadd.f32 %v231, %v1457
    %v1463 = vxor.u32 %v1459, 2147483648
    %v1464 = vmul.f32 %v1463, 1.442695
    %v1465 = vpow.pop %v1464
    %v1466 = vadd.f32 %v1465, 1.0
    %v1467 = vrcp.pop %v1466
    %v1468 = vmul.f32 1.0, %v1467
    %v1469 = vxor.u32 %v1460, 2147483648
    %v1470 = vmul.f32 %v1469, 1.442695
    %v1471 = vpow.pop %v1470
    %v1472 = vadd.f32 %v1471, 1.0
    %v1473 = vrcp.pop %v1472
    %v1474 = vmul.f32 1.0, %v1473
    %v1475 = vtanh.pop %v1461
    %v1476 = vxor.u32 %v1462, 2147483648
    %v1477 = vmul.f32 %v1476, 1.442695
    %v1478 = vpow.pop %v1477
    %v1479 = vadd.f32 %v1478, 1.0
    %v1480 = vrcp.pop %v1479
    %v1481 = vmul.f32 1.0, %v1480
    %v1482 = vmul.f32 %v1474, %v1314
    %v1483 = vmul.f32 %v1468, %v1475
    %v1484 = vadd.f32 %v1482, %v1483
    %v1485 = vtanh.pop %v1484
    %v1486 = vmul.f32 %v1481, %v1485
    %1487 = vmatprep.subr.mxu0 %v234
    %1488 = vmatpush1.msra.mxu0 %v233
    %1489 = vmatprep.subr.mxu0 %v238
    %1490 = vmatpush1.msra.mxu0 %v237
    %1491 = vmatprep.subr.mxu0 %v242
    %1492 = vmatpush1.msra.mxu0 %v241
    %1493 = vmatprep.subr.mxu0 %v246
    %1494 = vmatpush1.msra.mxu0 %v245
    %1495 = vmatprep.subr.mxu0 %v250
    %1496 = vmatpush1.msra.mxu0 %v249
    %1497 = vmatprep.subr.mxu0 %v254
    %1498 = vmatpush1.msra.mxu0 %v253
    %1499 = vmatprep.subr.mxu0 %v258
    %1500 = vmatpush1.msra.mxu0 %v257
    %1501 = vmatprep.subr.mxu0 %v262
    %1502 = vmatpush1.msra.mxu0 %v261
    %1503 = vmatprep.subr.mxu0 %v266
    %1504 = vmatpush1.msra.mxu0 %v265
    %1505 = vmatprep.subr.mxu0 %v270
    %1506 = vmatpush1.msra.mxu0 %v269
    %1507 = vmatprep.subr.mxu0 %v274
    %1508 = vmatpush1.msra.mxu0 %v273
    %1509 = vmatprep.subr.mxu0 %v278
    %1510 = vmatpush1.msra.mxu0 %v277
    %1511 = vmatprep.subr.mxu0 %v282
    %1512 = vmatpush1.msra.mxu0 %v281
    %1513 = vmatprep.subr.mxu0 %v286
    %1514 = vmatpush1.msra.mxu0 %v285
    %1515 = vmatprep.subr.mxu0 %v290
    %1516 = vmatpush1.msra.mxu0 %v289
    %1517 = vmatprep.subr.mxu0 %v294
    %1518 = vmatpush1.msra.mxu0 %v293
    %1519 = vmatprep.subr.mxu0 0.0
    %1520 = vmatpush1.msra.mxu0 0.0
    %1521 = vmatprep.subr.mxu0 0.0
    %1522 = vmatpush1.msra.mxu0 0.0
    %1523 = vmatprep.subr.mxu0 0.0
    %1524 = vmatpush1.msra.mxu0 0.0
    %1525 = vmatprep.subr.mxu0 0.0
    %1526 = vmatpush1.msra.mxu0 0.0
    %1527 = vmatprep.subr.mxu0 0.0
    %1528 = vmatpush1.msra.mxu0 0.0
    %1529 = vmatprep.subr.mxu0 0.0
    %1530 = vmatpush1.msra.mxu0 0.0
    %1531 = vmatprep.subr.mxu0 0.0
    %1532 = vmatpush1.msra.mxu0 0.0
    %1533 = vmatprep.subr.mxu0 0.0
    %1534 = vmatpush1.msra.mxu0 0.0
    %1535 = vmatprep.subr.mxu0 0.0
    %1536 = vmatpush1.msra.mxu0 0.0
    %1537 = vmatprep.subr.mxu0 0.0
    %1538 = vmatpush1.msra.mxu0 0.0
    %1539 = vmatprep.subr.mxu0 0.0
    %1540 = vmatpush1.msra.mxu0 0.0
    %1541 = vmatprep.subr.mxu0 0.0
    %1542 = vmatpush1.msra.mxu0 0.0
    %1543 = vmatprep.subr.mxu0 0.0
    %1544 = vmatpush1.msra.mxu0 0.0
    %1545 = vmatprep.subr.mxu0 0.0
    %1546 = vmatpush1.msra.mxu0 0.0
    %1547 = vmatprep.subr.mxu0 0.0
    %1548 = vmatpush1.msra.mxu0 0.0
    %1549 = vmatprep.subr.mxu0 0.0
    %1550 = vmatpush1.msra.mxu0 0.0
    %1551 = vmatprep.mubr.f32.mxu0 0.0
    %1552 = vmatmul.mubr.f32.gmra.mrb[0].mxu0 %v1486
    %v1553 = vpop.f32.mrb[0].mxu0
    %v1554 = vadd.f32 0.0, %v1553
    %v1555 = vpop.f32.mrb[0].mxu0
    %v1556 = vadd.f32 0.0, %v1555
    %1557 = vdwg.mxu0
    %1558 = vmatprep.subr.mxu0 %v236
    %1559 = vmatpush1.msra.mxu0 %v235
    %1560 = vmatprep.subr.mxu0 %v240
    %1561 = vmatpush1.msra.mxu0 %v239
    %1562 = vmatprep.subr.mxu0 %v244
    %1563 = vmatpush1.msra.mxu0 %v243
    %1564 = vmatprep.subr.mxu0 %v248
    %1565 = vmatpush1.msra.mxu0 %v247
    %1566 = vmatprep.subr.mxu0 %v252
    %1567 = vmatpush1.msra.mxu0 %v251
    %1568 = vmatprep.subr.mxu0 %v256
    %1569 = vmatpush1.msra.mxu0 %v255
    %1570 = vmatprep.subr.mxu0 %v260
    %1571 = vmatpush1.msra.mxu0 %v259
    %1572 = vmatprep.subr.mxu0 %v264
    %1573 = vmatpush1.msra.mxu0 %v263
    %1574 = vmatprep.subr.mxu0 %v268
    %1575 = vmatpush1.msra.mxu0 %v267
    %1576 = vmatprep.subr.mxu0 %v272
    %1577 = vmatpush1.msra.mxu0 %v271
    %1578 = vmatprep.subr.mxu0 %v276
    %1579 = vmatpush1.msra.mxu0 %v275
    %1580 = vmatprep.subr.mxu0 %v280
    %1581 = vmatpush1.msra.mxu0 %v279
    %1582 = vmatprep.subr.mxu0 %v284
    %1583 = vmatpush1.msra.mxu0 %v283
    %1584 = vmatprep.subr.mxu0 %v288
    %1585 = vmatpush1.msra.mxu0 %v287
    %1586 = vmatprep.subr.mxu0 %v292
    %1587 = vmatpush1.msra.mxu0 %v291
    %1588 = vmatprep.subr.mxu0 %v296
    %1589 = vmatpush1.msra.mxu0 %v295
    %1590 = vmatprep.subr.mxu0 0.0
    %1591 = vmatpush1.msra.mxu0 0.0
    %1592 = vmatprep.subr.mxu0 0.0
    %1593 = vmatpush1.msra.mxu0 0.0
    %1594 = vmatprep.subr.mxu0 0.0
    %1595 = vmatpush1.msra.mxu0 0.0
    %1596 = vmatprep.subr.mxu0 0.0
    %1597 = vmatpush1.msra.mxu0 0.0
    %1598 = vmatprep.subr.mxu0 0.0
    %1599 = vmatpush1.msra.mxu0 0.0
    %1600 = vmatprep.subr.mxu0 0.0
    %1601 = vmatpush1.msra.mxu0 0.0
    %1602 = vmatprep.subr.mxu0 0.0
    %1603 = vmatpush1.msra.mxu0 0.0
    %1604 = vmatprep.subr.mxu0 0.0
    %1605 = vmatpush1.msra.mxu0 0.0
    %1606 = vmatprep.subr.mxu0 0.0
    %1607 = vmatpush1.msra.mxu0 0.0
    %1608 = vmatprep.subr.mxu0 0.0
    %1609 = vmatpush1.msra.mxu0 0.0
    %1610 = vmatprep.subr.mxu0 0.0
    %1611 = vmatpush1.msra.mxu0 0.0
    %1612 = vmatprep.subr.mxu0 0.0
    %1613 = vmatpush1.msra.mxu0 0.0
    %1614 = vmatprep.subr.mxu0 0.0
    %1615 = vmatpush1.msra.mxu0 0.0
    %1616 = vmatprep.subr.mxu0 0.0
    %1617 = vmatpush1.msra.mxu0 0.0
    %1618 = vmatprep.subr.mxu0 0.0
    %1619 = vmatpush1.msra.mxu0 0.0
    %1620 = vmatprep.subr.mxu0 0.0
    %1621 = vmatpush1.msra.mxu0 0.0
    %1622 = vmatprep.mubr.f32.mxu0 0.0
    %1623 = vmatmul.mubr.f32.gmra.mrb[0].mxu0 %v1486
    %v1624 = vpop.f32.mrb[0].mxu0
    %v1625 = vadd.f32 0.0, %v1624
    %v1626 = vpop.f32.mrb[0].mxu0
    %v1627 = vadd.f32 0.0, %v1626
    %1628 = vdwg.mxu0
    %v1629 = vadd.f32 %v158, %v1554
    %v1630 = vadd.f32 %v160, %v1556
    %v1631 = vadd.f32 %v229, %v1625
    %v1632 = vadd.f32 %v231, %v1627
    %v1633 = vxor.u32 %v1629, 2147483648
    %v1634 = vmul.f32 %v1633, 1.442695
    %v1635 = vpow.pop %v1634
    %v1636 = vadd.f32 %v1635, 1.0
    %v1637 = vrcp.pop %v1636
    %v1638 = vmul.f32 1.0, %v1637
    %v1639 = vxor.u32 %v1630, 2147483648
    %v1640 = vmul.f32 %v1639, 1.442695
    %v1641 = vpow.pop %v1640
    %v1642 = vadd.f32 %v1641, 1.0
    %v1643 = vrcp.pop %v1642
    %v1644 = vmul.f32 1.0, %v1643
    %v1645 = vtanh.pop %v1631
    %v1646 = vxor.u32 %v1632, 2147483648
    %v1647 = vmul.f32 %v1646, 1.442695
    %v1648 = vpow.pop %v1647
    %v1649 = vadd.f32 %v1648, 1.0
    %v1650 = vrcp.pop %v1649
    %v1651 = vmul.f32 1.0, %v1650
    %v1652 = vmul.f32 %v1644, %v1484
    %v1653 = vmul.f32 %v1638, %v1645
    %v1654 = vadd.f32 %v1652, %v1653
    %v1655 = vtanh.pop %v1654
    %v1656 = vmul.f32 %v1651, %v1655
    %v1658 = vrot.slane %v636, 7
    %v1661 = vrot.slane %v806, 6
    %v1664 = vrot.slane %v976, 5
    %v1667 = vrot.slane %v1146, 4
    %v1670 = vrot.slane %v1316, 3
    %v1673 = vrot.slane %v1486, 2
    %v1676 = vrot.slane %v1656, 1
    %vm1678 = vcmask 1040384
    %v1679 = vsel %vm1678, %v466, %v1658
    %vm1680 = vcmask 1041408
    %v1681 = vsel %vm1680, %v1679, %v1661
    %vm1682 = vcmask 1042432
    %v1683 = vsel %vm1682, %v1681, %v1664
    %v1684 = vsel %vm78, %v1683, %v1667
    %vm1685 = vcmask 1044480
    %v1686 = vsel %vm1685, %v1684, %v1670
    %vm1687 = vcmask 1045504
    %v1688 = vsel %vm1687, %v1686, %v1673
    %vm1689 = vcmask 1046528
    %v1690 = vsel %vm1689, %v1688, %v1676
    %v1691 = vld [vmem:[%s4] sm:$0xff]
    %v1692 = vld [vmem:[%s4 + $0x8] sm:$0xff]
    %v1693 = vld [vmem:[%s4 + $0x10] sm:$0xff]
    %v1694 = vld [vmem:[%s4 + $0x18] sm:$0xff]
    %v1695 = vld [vmem:[%s4 + $0x20] sm:$0xff]
    %v1696 = vld [vmem:[%s4 + $0x28] sm:$0xff]
    %v1697 = vld [vmem:[%s4 + $0x30] sm:$0xff]
    %v1698 = vld [vmem:[%s4 + $0x38] sm:$0xff]
    %v1699 = vld [vmem:[%s4 + $0x40] sm:$0xff]
    %v1700 = vld [vmem:[%s4 + $0x48] sm:$0xff]
    %v1701 = vld [vmem:[%s4 + $0x50] sm:$0xff]
    %v1702 = vld [vmem:[%s4 + $0x58] sm:$0xff]
    %v1703 = vld [vmem:[%s4 + $0x60] sm:$0xff]
    %v1704 = vld [vmem:[%s4 + $0x68] sm:$0xff]
    %v1705 = vld [vmem:[%s4 + $0x70] sm:$0xff]
    %v1706 = vld [vmem:[%s4 + $0x78] sm:$0xff]
    %v1707 = vld [vmem:[#allocation2] sm:$0x1]
    %v1709 = vlaneseq
    %v1710 = vshrl.u32 %v1709, 7
    %v1711 = vsub.s32 0, %v1710
    %v1712 = vrot.slane %v1707, %v1711
    %1714 = vmatprep.subr.mxu0 0.0
    %1715 = vmatpush1.msra.mxu0 %v1691
    %1716 = vmatprep.subr.mxu0 0.0
    %1717 = vmatpush1.msra.mxu0 %v1692
    %1718 = vmatprep.subr.mxu0 0.0
    %1719 = vmatpush1.msra.mxu0 %v1693
    %1720 = vmatprep.subr.mxu0 0.0
    %1721 = vmatpush1.msra.mxu0 %v1694
    %1722 = vmatprep.subr.mxu0 0.0
    %1723 = vmatpush1.msra.mxu0 %v1695
    %1724 = vmatprep.subr.mxu0 0.0
    %1725 = vmatpush1.msra.mxu0 %v1696
    %1726 = vmatprep.subr.mxu0 0.0
    %1727 = vmatpush1.msra.mxu0 %v1697
    %1728 = vmatprep.subr.mxu0 0.0
    %1729 = vmatpush1.msra.mxu0 %v1698
    %1730 = vmatprep.subr.mxu0 0.0
    %1731 = vmatpush1.msra.mxu0 %v1699
    %1732 = vmatprep.subr.mxu0 0.0
    %1733 = vmatpush1.msra.mxu0 %v1700
    %1734 = vmatprep.subr.mxu0 0.0
    %1735 = vmatpush1.msra.mxu0 %v1701
    %1736 = vmatprep.subr.mxu0 0.0
    %1737 = vmatpush1.msra.mxu0 %v1702
    %1738 = vmatprep.subr.mxu0 0.0
    %1739 = vmatpush1.msra.mxu0 %v1703
    %1740 = vmatprep.subr.mxu0 0.0
    %1741 = vmatpush1.msra.mxu0 %v1704
    %1742 = vmatprep.subr.mxu0 0.0
    %1743 = vmatpush1.msra.mxu0 %v1705
    %1744 = vmatprep.subr.mxu0 0.0
    %1745 = vmatpush1.msra.mxu0 %v1706
    %1746 = vmatprep.subr.mxu0 0.0
    %1747 = vmatpush1.msra.mxu0 0.0
    %1748 = vmatprep.subr.mxu0 0.0
    %1749 = vmatpush1.msra.mxu0 0.0
    %1750 = vmatprep.subr.mxu0 0.0
    %1751 = vmatpush1.msra.mxu0 0.0
    %1752 = vmatprep.subr.mxu0 0.0
    %1753 = vmatpush1.msra.mxu0 0.0
    %1754 = vmatprep.subr.mxu0 0.0
    %1755 = vmatpush1.msra.mxu0 0.0
    %1756 = vmatprep.subr.mxu0 0.0
    %1757 = vmatpush1.msra.mxu0 0.0
    %1758 = vmatprep.subr.mxu0 0.0
    %1759 = vmatpush1.msra.mxu0 0.0
    %1760 = vmatprep.subr.mxu0 0.0
    %1761 = vmatpush1.msra.mxu0 0.0
    %1762 = vmatprep.subr.mxu0 0.0
    %1763 = vmatpush1.msra.mxu0 0.0
    %1764 = vmatprep.subr.mxu0 0.0
    %1765 = vmatpush1.msra.mxu0 0.0
    %1766 = vmatprep.subr.mxu0 0.0
    %1767 = vmatpush1.msra.mxu0 0.0
    %1768 = vmatprep.subr.mxu0 0.0
    %1769 = vmatpush1.msra.mxu0 0.0
    %1770 = vmatprep.subr.mxu0 0.0
    %1771 = vmatpush1.msra.mxu0 0.0
    %1772 = vmatprep.subr.mxu0 0.0
    %1773 = vmatpush1.msra.mxu0 0.0
    %1774 = vmatprep.subr.mxu0 0.0
    %1775 = vmatpush1.msra.mxu0 0.0
    %1776 = vmatprep.subr.mxu0 0.0
    %1777 = vmatpush1.msra.mxu0 0.0
    %1778 = vmatprep.mubr.f32.mxu0 0.0
    %1779 = vmatmul.mubr.f32.gmra.mrb[0].mxu0 %v1690
    %v1780 = vpop.f32.mrb[0].mxu0
    %v1781 = vadd.f32 %v1712, %v1780
    %v1782 = vpop.f32.mrb[0].mxu0
    %1783 = vdwg.mxu0
    %vm1784 = vcmask 7168
    %1785 = vst.msk [vmem:[%s6] sm:$0xff] %vm1784, %v1781
    // Predicated region
    $region30: #{tpu_custom_call.1} parent=1 // pred_check
      _
    $region31: #{tpu_custom_call.1} parent=1 // pred_check_branch
      %1787 = sbr.rel (0) target = $region33
    $region32: #{tpu_custom_call.1} parent=1 // pred_region
      _
    $region33: #{tpu_custom_call.1} parent=1 // pred_fallthru
      _
    // Predicated region
    $region34: #{tpu_custom_call.1} parent=1 // pred_check
      _
    $region35: #{tpu_custom_call.1} parent=1 // pred_check_branch
      %1789 = sbr.rel (0) target = $region37
    $region36: #{tpu_custom_call.1} parent=1 // pred_region
      _
    $region37: #{tpu_custom_call.1} parent=1 // pred_fallthru
      _
    %1790 = vsyncpa [#allocation4], 1

</llo_original>
